<compile_context>
chip_gen: v6e
topology: v6e:2x2x1
jax: 0.10.0
libtpu: 0.0.40
codegen_flags: <defaults>
</compile_context>

<pallas_src>
import functools

import jax
import jax.numpy as jnp
import numpy as np
from jax.experimental import pallas as pl
from jax.experimental.pallas import tpu as pltpu

LANE = 128
# Keep (resident adj, double-buffered) comfortably inside the smallest default
# scoped-VMEM limit (16 MiB on v5e).
_ADJ_RESIDENT_BYTES = 4 << 20


def _round_up(n, m):
    return ((n + m - 1) // m) * m


def _fused_gnn_kernel(adj_ref, x_ref, w1_ref, wr1_ref, b1_ref,
                      w2_ref, wr2_ref, b2_ref,
                      o_ref, h_ref, *, tm, adj_resident):
    """Two fused GraphConv layers.

    grid = (phase, row_tile):
      phase 0: h[rows i] = relu((A[rows i,:] @ X) @ W1 + X[rows i] @ Wr1 + b1)
               stored into the persistent bf16 VMEM scratch h_ref.
      phase 1: out[rows i] = (A[rows i,:] @ h) @ W2 + h[rows i] @ Wr2 + b2
    """
    phase = pl.program_id(0)
    i = pl.program_id(1)
    row0 = pl.multiple_of(i * tm, tm)

    # Adjacency strip (tm, N_pad): int8 in HBM (exact small multiplicities),
    # upcast to bf16 in-register so the big dots run bf16 x bf16 -> f32 on the MXU.
    if adj_resident:
        a = adj_ref[pl.ds(row0, tm), :].astype(jnp.bfloat16)
    else:
        a = adj_ref[...].astype(jnp.bfloat16)

    @pl.when(phase == 0)
    def _layer1():
        agg = jnp.dot(a, x_ref[...], preferred_element_type=jnp.float32)
        h = jnp.dot(agg, w1_ref[...], preferred_element_type=jnp.float32)
        xi = x_ref[pl.ds(row0, tm), :].astype(jnp.float32)
        h = h + jnp.dot(xi, wr1_ref[...], preferred_element_type=jnp.float32)
        h = jnp.maximum(h + b1_ref[...], 0.0)
        h_ref[pl.ds(row0, tm), :] = h.astype(h_ref.dtype)
        # No o_ref write in phase 0: the out_specs index_map keeps the output
        # block index constant across phase 0, so nothing is flushed to HBM here.

    @pl.when(phase == 1)
    def _layer2():
        agg2 = jnp.dot(a, h_ref[...], preferred_element_type=jnp.float32)
        out = jnp.dot(agg2, w2_ref[...], preferred_element_type=jnp.float32)
        hi = h_ref[pl.ds(row0, tm), :].astype(jnp.float32)
        out = out + jnp.dot(hi, wr2_ref[...], preferred_element_type=jnp.float32)
        out = out + b2_ref[...]
        o_ref[...] = out.astype(o_ref.dtype)


def model_forward(x, edge_index, params, *, tile_m=128):
    """Full Model.forward: conv1 -> relu -> conv2, as one fused Pallas kernel.

    x:          [N, in_channels] float32
    edge_index: [2, E] int32, edge_index[0]=src (j), edge_index[1]=dst (i)
    """
    n, c_in = x.shape
    hid = params["conv1"]["w_rel"].shape[1]
    c_out = params["conv2"]["w_rel"].shape[1]

    n_pad = _round_up(max(n, tile_m), tile_m)
    cin_p = _round_up(c_in, LANE)
    hid_p = _round_up(hid, LANE)
    out_p = _round_up(c_out, LANE)

    src, dst = edge_index[0], edge_index[1]
    # Dense adjacency so that (A @ X)[i] = sum over edges j->i of X[j] (duplicate
    # edges add, matching scatter-add).  Built with an integer scatter-add (no
    # f32 N^2 buffer + recast) and stored as int8: exact for edge multiplicity
    # <= 127, which holds for any reasonable graph.
    adj = jnp.zeros((n_pad, n_pad), jnp.int32).at[dst, src].add(1).astype(jnp.int8)

    def pad2(a, r, c, dtype=jnp.float32):
        a = a.astype(jnp.float32)
        return jnp.pad(a, ((0, r - a.shape[0]), (0, c - a.shape[1]))).astype(dtype)

    # X is bf16 so the aggregation matmul is bf16 x bf16; weights/bias stay f32
    # (tiny, resident) for the feature-transform terms.
    x_p = pad2(x, n_pad, cin_p, jnp.bfloat16)
    w1 = pad2(params["conv1"]["w_rel"], cin_p, hid_p)
    wr1 = pad2(params["conv1"]["w_root"], cin_p, hid_p)
    b1 = pad2(params["conv1"]["b"], 1, hid_p)
    w2 = pad2(params["conv2"]["w_rel"], hid_p, out_p)
    wr2 = pad2(params["conv2"]["w_root"], hid_p, out_p)
    b2 = pad2(params["conv2"]["b"], 1, out_p)

    num_row_tiles = n_pad // tile_m
    adj_resident = (n_pad * n_pad) <= _ADJ_RESIDENT_BYTES  # int8 bytes
    kernel = functools.partial(_fused_gnn_kernel, tm=tile_m,
                               adj_resident=adj_resident)

    if adj_resident:
        # Constant index_map: A is DMA'd from HBM exactly once for both phases.
        adj_spec = pl.BlockSpec((n_pad, n_pad), lambda p, i: (0, 0))
    else:
        # Streamed int8 row strips (A is re-read in phase 1, but at half the
        # bytes of bf16).
        adj_spec = pl.BlockSpec((tile_m, n_pad), lambda p, i: (i, 0))

    def resident(shape):
        return pl.BlockSpec(shape, lambda p, i: (0, 0))

    out_full = pl.pallas_call(
        kernel,
        out_shape=jax.ShapeDtypeStruct((n_pad, out_p), jnp.float32),
        grid_spec=pltpu.PrefetchScalarGridSpec(
            num_scalar_prefetch=0,
            grid=(2, num_row_tiles),
            in_specs=[
                adj_spec,                         # adjacency (int8)
                resident((n_pad, cin_p)),         # full X (bf16, agg + root slice)
                resident((cin_p, hid_p)),         # W_rel1
                resident((cin_p, hid_p)),         # W_root1
                resident((1, hid_p)),             # b1
                resident((hid_p, out_p)),         # W_rel2
                resident((hid_p, out_p)),         # W_root2
                resident((1, out_p)),             # b2
            ],
            # All phase-0 steps map to output block (0, 0); the block only flushes
            # to HBM once it has been overwritten with real phase-1 data.
            out_specs=pl.BlockSpec((tile_m, out_p), lambda p, i: (i * p, 0)),
            scratch_shapes=[pltpu.VMEM((n_pad, hid_p), jnp.bfloat16)],  # persistent h
        ),
        compiler_params=pltpu.CompilerParams(
            # phase axis must run sequentially (layer-2 needs all of layer-1's h);
            # row axis kept "arbitrary" so the cross-phase VMEM scratch stays valid.
            dimension_semantics=("arbitrary", "arbitrary"),
        ),
    )(adj, x_p, w1, wr1, b1, w2, wr2, b2)

    return out_full[:n, :c_out]


def init_params(key, in_channels, hidden_channels, out_channels):
    """Deterministic synthetic parameter init (shapes match GraphConv linears)."""
    def layer(key, c_in, c_out):
        k1, k2, k3 = jax.random.split(key, 3)
        scale = 1.0 / np.sqrt(c_in)
        return {
            # stored as [C_in, C_out] (transposed torch Linear weight)
            "w_rel": jax.random.uniform(k1, (c_in, c_out), jnp.float32, -scale, scale),
            "w_root": jax.random.uniform(k2, (c_in, c_out), jnp.float32, -scale, scale),
            "b": jax.random.uniform(k3, (1, c_out), jnp.float32, -scale, scale),
        }

    k1, k2 = jax.random.split(key)
    return {
        "conv1": layer(k1, in_channels, hidden_channels),
        "conv2": layer(k2, hidden_channels, out_channels),
    }


def _reference_forward(x, edge_index, params):
    """Plain-JAX f32 reference for correctness checking."""
    n = x.shape[0]
    src, dst = edge_index[0], edge_index[1]
    adj = jnp.zeros((n, n), jnp.float32).at[dst, src].add(1.0)

    def layer(x, p):
        return (adj @ x) @ p["w_rel"] + x @ p["w_root"] + p["b"]

    h = jax.nn.relu(layer(x, params["conv1"]))
    return layer(h, params["conv2"])


if __name__ == "__main__":
    N = 16            # number of graph nodes
    E = 40            # number of edges
    IN_C, HID_C, OUT_C = 8, 32, 4

    key = jax.random.PRNGKey(0)
    k_x, k_e, k_p = jax.random.split(key, 3)

    x = jax.random.normal(k_x, (N, IN_C), dtype=jnp.float32)
    edge_index = jax.random.randint(k_e, (2, E), 0, N, dtype=jnp.int32)
    params = init_params(k_p, IN_C, HID_C, OUT_C)

    out = jax.jit(model_forward)(x, edge_index, params)
    out = jax.block_until_ready(out)

    ref = jax.block_until_ready(_reference_forward(x, edge_index, params))
    assert out.shape == (N, OUT_C)
    # bf16 X / h inside the kernel => compare against the f32 reference with a
    # correspondingly looser tolerance.
    np.testing.assert_allclose(np.asarray(out), np.asarray(ref), rtol=2e-2, atol=5e-2)

    print("KERNEL_OK")
</pallas_src>

<mosaic_0001>
module attributes {stable_mosaic.version = 11 : i64} {
  func.func private @main(%arg0: i32) attributes {dimension_semantics = [#tpu.dimension_semantics<core_parallel>], iteration_bounds = array<i64: 2>, tpu.core_type = #tpu.core_type<sc_scalar_subcore>, window_params = []} {
    return
  }
}

module attributes {stable_mosaic.version = 11 : i64} {
  func.func private @main(%arg0: i32) attributes {dimension_semantics = [#tpu.dimension_semantics<core_parallel>], iteration_bounds = array<i64: 2>, tpu.core_type = #tpu.core_type<sc_scalar_subcore>, window_params = []} {
    return
  }
}

module attributes {stable_mosaic.version = 11 : i64} {
  func.func @_fused_gnn_kernel(%arg0: i32, %arg1: i32, %arg2: memref<128x128xi8, #tpu.memory_space<vmem>>, %arg3: memref<128x128xbf16, #tpu.memory_space<vmem>>, %arg4: memref<128x128xf32, #tpu.memory_space<vmem>>, %arg5: memref<128x128xf32, #tpu.memory_space<vmem>>, %arg6: memref<1x128xf32, #tpu.memory_space<vmem>>, %arg7: memref<128x128xf32, #tpu.memory_space<vmem>>, %arg8: memref<128x128xf32, #tpu.memory_space<vmem>>, %arg9: memref<1x128xf32, #tpu.memory_space<vmem>>, %arg10: memref<128x128xf32, #tpu.memory_space<vmem>>, %arg11: memref<128x128xbf16, #tpu.memory_space<vmem>>) attributes {dimension_semantics = [#tpu.dimension_semantics<arbitrary>, #tpu.dimension_semantics<arbitrary>], iteration_bounds = array<i64: 2, 1>, scalar_prefetch = 0 : i64, scratch_operands = 1 : i64, tpu.core_type = #tpu.core_type<tc>, window_params = [{pipeline_mode = #tpu.pipeline_mode<synchronous>, transform_indices = @transform_0, window_bounds = array<i64: 128, 128>}, {pipeline_mode = #tpu.pipeline_mode<synchronous>, transform_indices = @transform_1, window_bounds = array<i64: 128, 128>}, {pipeline_mode = #tpu.pipeline_mode<synchronous>, transform_indices = @transform_2, window_bounds = array<i64: 128, 128>}, {pipeline_mode = #tpu.pipeline_mode<synchronous>, transform_indices = @transform_3, window_bounds = array<i64: 128, 128>}, {pipeline_mode = #tpu.pipeline_mode<synchronous>, transform_indices = @transform_4, window_bounds = array<i64: 1, 128>}, {pipeline_mode = #tpu.pipeline_mode<synchronous>, transform_indices = @transform_5, window_bounds = array<i64: 128, 128>}, {pipeline_mode = #tpu.pipeline_mode<synchronous>, transform_indices = @transform_6, window_bounds = array<i64: 128, 128>}, {pipeline_mode = #tpu.pipeline_mode<synchronous>, transform_indices = @transform_7, window_bounds = array<i64: 1, 128>}, {transform_indices = @transform_8, window_bounds = array<i64: 128, 128>}]} {
    %c128_i32 = arith.constant 128 : i32
    %0 = arith.muli %arg1, %c128_i32 : i32
    %1 = tpu.assume_multiple %0, 128 : i32
    %2 = arith.index_cast %1 : i32 to index
    %c0 = arith.constant 0 : index
    %3 = vector.load %arg2[%2, %c0] : memref<128x128xi8, #tpu.memory_space<vmem>>, vector<128x128xi8>
    %4 = arith.sitofp %3 : vector<128x128xi8> to vector<128x128xbf16>
    %c0_i32 = arith.constant 0 : i32
    %5 = arith.cmpi eq, %arg0, %c0_i32 : i32
    %6 = arith.extui %5 : i1 to i32
    %c0_i32_0 = arith.constant 0 : i32
    %7 = arith.cmpi ne, %6, %c0_i32_0 : i32
    scf.if %7 {
      %c0_2 = arith.constant 0 : index
      %c0_3 = arith.constant 0 : index
      %11 = vector.load %arg3[%c0_2, %c0_3] : memref<128x128xbf16, #tpu.memory_space<vmem>>, vector<128x128xbf16>
      %cst = arith.constant dense<0.000000e+00> : vector<128x128xf32>
      %12 = tpu.matmul %4, %11, %cst {dimension_numbers = #tpu.dot_dimension_numbers<[1], [0], [0], [1], [0, 0, 1, 1], [], []>} : vector<128x128xbf16>, vector<128x128xbf16>, vector<128x128xf32> -> vector<128x128xf32>
      %c0_4 = arith.constant 0 : index
      %c0_5 = arith.constant 0 : index
      %13 = vector.load %arg4[%c0_4, %c0_5] : memref<128x128xf32, #tpu.memory_space<vmem>>, vector<128x128xf32>
      %cst_6 = arith.constant dense<0.000000e+00> : vector<128x128xf32>
      %14 = tpu.matmul %12, %13, %cst_6 {dimension_numbers = #tpu.dot_dimension_numbers<[1], [0], [0], [1], [0, 0, 1, 1], [], []>} : vector<128x128xf32>, vector<128x128xf32>, vector<128x128xf32> -> vector<128x128xf32>
      %15 = arith.index_cast %1 : i32 to index
      %c0_7 = arith.constant 0 : index
      %16 = vector.load %arg3[%15, %c0_7] : memref<128x128xbf16, #tpu.memory_space<vmem>>, vector<128x128xbf16>
      %17 = arith.extf %16 : vector<128x128xbf16> to vector<128x128xf32>
      %c0_8 = arith.constant 0 : index
      %c0_9 = arith.constant 0 : index
      %18 = vector.load %arg5[%c0_8, %c0_9] : memref<128x128xf32, #tpu.memory_space<vmem>>, vector<128x128xf32>
      %cst_10 = arith.constant dense<0.000000e+00> : vector<128x128xf32>
      %19 = tpu.matmul %17, %18, %cst_10 {dimension_numbers = #tpu.dot_dimension_numbers<[1], [0], [0], [1], [0, 0, 1, 1], [], []>} : vector<128x128xf32>, vector<128x128xf32>, vector<128x128xf32> -> vector<128x128xf32>
      %20 = arith.addf %14, %19 : vector<128x128xf32>
      %c0_11 = arith.constant 0 : index
      %c0_12 = arith.constant 0 : index
      %21 = vector.load %arg6[%c0_11, %c0_12] : memref<1x128xf32, #tpu.memory_space<vmem>>, vector<1x128xf32>
      %22 = vector.broadcast %21 : vector<1x128xf32> to vector<128x128xf32>
      %23 = arith.addf %20, %22 : vector<128x128xf32>
      %cst_13 = arith.constant 0.000000e+00 : f32
      %24 = vector.broadcast %cst_13 : f32 to vector<128x128xf32>
      %25 = arith.maximumf %23, %24 : vector<128x128xf32>
      %26 = arith.truncf %25 : vector<128x128xf32> to vector<128x128xbf16>
      %27 = arith.index_cast %1 : i32 to index
      %c0_14 = arith.constant 0 : index
      %28 = vector.load %arg11[%27, %c0_14] : memref<128x128xbf16, #tpu.memory_space<vmem>>, vector<128x128xbf16>
      tpu.vector_store %arg11[%27, %c0_14], %26 {strides = array<i32>} : memref<128x128xbf16, #tpu.memory_space<vmem>>, vector<128x128xbf16>,
    } else {
    }
    %c1_i32 = arith.constant 1 : i32
    %8 = arith.cmpi eq, %arg0, %c1_i32 : i32
    %9 = arith.extui %8 : i1 to i32
    %c0_i32_1 = arith.constant 0 : i32
    %10 = arith.cmpi ne, %9, %c0_i32_1 : i32
    scf.if %10 {
      %c0_2 = arith.constant 0 : index
      %c0_3 = arith.constant 0 : index
      %11 = vector.load %arg11[%c0_2, %c0_3] : memref<128x128xbf16, #tpu.memory_space<vmem>>, vector<128x128xbf16>
      %cst = arith.constant dense<0.000000e+00> : vector<128x128xf32>
      %12 = tpu.matmul %4, %11, %cst {dimension_numbers = #tpu.dot_dimension_numbers<[1], [0], [0], [1], [0, 0, 1, 1], [], []>} : vector<128x128xbf16>, vector<128x128xbf16>, vector<128x128xf32> -> vector<128x128xf32>
      %c0_4 = arith.constant 0 : index
      %c0_5 = arith.constant 0 : index
      %13 = vector.load %arg7[%c0_4, %c0_5] : memref<128x128xf32, #tpu.memory_space<vmem>>, vector<128x128xf32>
      %cst_6 = arith.constant dense<0.000000e+00> : vector<128x128xf32>
      %14 = tpu.matmul %12, %13, %cst_6 {dimension_numbers = #tpu.dot_dimension_numbers<[1], [0], [0], [1], [0, 0, 1, 1], [], []>} : vector<128x128xf32>, vector<128x128xf32>, vector<128x128xf32> -> vector<128x128xf32>
      %15 = arith.index_cast %1 : i32 to index
      %c0_7 = arith.constant 0 : index
      %16 = vector.load %arg11[%15, %c0_7] : memref<128x128xbf16, #tpu.memory_space<vmem>>, vector<128x128xbf16>
      %17 = arith.extf %16 : vector<128x128xbf16> to vector<128x128xf32>
      %c0_8 = arith.constant 0 : index
      %c0_9 = arith.constant 0 : index
      %18 = vector.load %arg8[%c0_8, %c0_9] : memref<128x128xf32, #tpu.memory_space<vmem>>, vector<128x128xf32>
      %cst_10 = arith.constant dense<0.000000e+00> : vector<128x128xf32>
      %19 = tpu.matmul %17, %18, %cst_10 {dimension_numbers = #tpu.dot_dimension_numbers<[1], [0], [0], [1], [0, 0, 1, 1], [], []>} : vector<128x128xf32>, vector<128x128xf32>, vector<128x128xf32> -> vector<128x128xf32>
      %20 = arith.addf %14, %19 : vector<128x128xf32>
      %c0_11 = arith.constant 0 : index
      %c0_12 = arith.constant 0 : index
      %21 = vector.load %arg9[%c0_11, %c0_12] : memref<1x128xf32, #tpu.memory_space<vmem>>, vector<1x128xf32>
      %22 = vector.broadcast %21 : vector<1x128xf32> to vector<128x128xf32>
      %23 = arith.addf %20, %22 : vector<128x128xf32>
      %c0_13 = arith.constant 0 : index
      %c0_14 = arith.constant 0 : index
      %24 = vector.load %arg10[%c0_13, %c0_14] : memref<128x128xf32, #tpu.memory_space<vmem>>, vector<128x128xf32>
      tpu.vector_store %arg10[%c0_13, %c0_14], %23 {strides = array<i32>} : memref<128x128xf32, #tpu.memory_space<vmem>>, vector<128x128xf32>,
    } else {
    }
    return
  }
  func.func @transform_0(%arg0: i32, %arg1: i32) -> (i32, i32) {
    %c0_i32 = arith.constant 0 : i32
    %c0_i32_0 = arith.constant 0 : i32
    %c0_i32_1 = arith.constant 0 : i32
    return %c0_i32, %c0_i32_0 : i32, i32
  }
  func.func @transform_1(%arg0: i32, %arg1: i32) -> (i32, i32) {
    %c0_i32 = arith.constant 0 : i32
    %c0_i32_0 = arith.constant 0 : i32
    %c0_i32_1 = arith.constant 0 : i32
    return %c0_i32, %c0_i32_0 : i32, i32
  }
  func.func @transform_2(%arg0: i32, %arg1: i32) -> (i32, i32) {
    %c0_i32 = arith.constant 0 : i32
    %c0_i32_0 = arith.constant 0 : i32
    %c0_i32_1 = arith.constant 0 : i32
    return %c0_i32, %c0_i32_0 : i32, i32
  }
  func.func @transform_3(%arg0: i32, %arg1: i32) -> (i32, i32) {
    %c0_i32 = arith.constant 0 : i32
    %c0_i32_0 = arith.constant 0 : i32
    %c0_i32_1 = arith.constant 0 : i32
    return %c0_i32, %c0_i32_0 : i32, i32
  }
  func.func @transform_4(%arg0: i32, %arg1: i32) -> (i32, i32) {
    %c0_i32 = arith.constant 0 : i32
    %c0_i32_0 = arith.constant 0 : i32
    %c0_i32_1 = arith.constant 0 : i32
    return %c0_i32, %c0_i32_0 : i32, i32
  }
  func.func @transform_5(%arg0: i32, %arg1: i32) -> (i32, i32) {
    %c0_i32 = arith.constant 0 : i32
    %c0_i32_0 = arith.constant 0 : i32
    %c0_i32_1 = arith.constant 0 : i32
    return %c0_i32, %c0_i32_0 : i32, i32
  }
  func.func @transform_6(%arg0: i32, %arg1: i32) -> (i32, i32) {
    %c0_i32 = arith.constant 0 : i32
    %c0_i32_0 = arith.constant 0 : i32
    %c0_i32_1 = arith.constant 0 : i32
    return %c0_i32, %c0_i32_0 : i32, i32
  }
  func.func @transform_7(%arg0: i32, %arg1: i32) -> (i32, i32) {
    %c0_i32 = arith.constant 0 : i32
    %c0_i32_0 = arith.constant 0 : i32
    %c0_i32_1 = arith.constant 0 : i32
    return %c0_i32, %c0_i32_0 : i32, i32
  }
  func.func @transform_8(%arg0: i32, %arg1: i32) -> (i32, i32) {
    %0 = arith.muli %arg1, %arg0 : i32
    %c0_i32 = arith.constant 0 : i32
    %c0_i32_0 = arith.constant 0 : i32
    return %0, %c0_i32 : i32, i32
  }
}

</mosaic_0001>

<llo_original>
// kernel: model_forward.1
$region0: #{model_forward.1}
  #allocation0 [shape = 'u32[]', space=smem, size = 0x4, offset = 0x4, fixed_abs, tag = 'smem constant byte address 0x4 - core index']
  #allocation1 [shape = 'u32[144,128]{1,0:T(1,128)}', space=vmem, size = 0x12000, scoped, tag = 'internal scratch']
  #allocation2 [shape = 'bf16[128,128]{1,0:T(8,128)(2,1)}', space=vmem, size = 0x8000, scoped, tag = 'scratch operand']
  %s0 = inlined_call_operand.vmem [shape: s8[128,128], index: 0, kind: input, shape index: {}]
  %s1 = inlined_call_operand.vmem [shape: bf16[128,128], index: 1, kind: input, shape index: {}]
  %s2 = inlined_call_operand.vmem [shape: f32[128,128], index: 2, kind: input, shape index: {}]
  %s3 = inlined_call_operand.vmem [shape: f32[128,128], index: 3, kind: input, shape index: {}]
  %s4 = inlined_call_operand.vmem [shape: f32[1,128], index: 4, kind: input, shape index: {}]
  %s5 = inlined_call_operand.vmem [shape: f32[128,128], index: 5, kind: input, shape index: {}]
  %s6 = inlined_call_operand.vmem [shape: f32[128,128], index: 6, kind: input, shape index: {}]
  %s7 = inlined_call_operand.vmem [shape: f32[1,128], index: 7, kind: input, shape index: {}]
  %s8 = inlined_call_operand.vmem [shape: f32[128,128], index: 8, kind: output, shape index: {}]
  %s9 = sld [smem:[#allocation0]]
  $region73: #{model_forward.1} parent=0
    _
  %s11 = ssub.s32 1, %s9
  %s12 = scalar_select 0, %s11, %s9
  loop: start=0, step=1, limit=4
  $region2: #{model_forward.1} parent=0 // loop_pre_header
    _
  $region3: #{model_forward.1} parent=0 // loop_header
    %s14 = sphi 0, %s18
    %p15 = scmp.ge.s32.totalorder %s14, 4
    %s21 = sphi 0, %s33
    %s22 = sphi 0, %s29
    %s23 = sphi 0, %s21
    %s24 = sphi 0, %s22
    %s25 = sphi 0, %s23
    %s26 = sphi 0, %s24
    %s34 = sphi 0, %s34
    %s36 = sphi 0, %s34
    %s37 = sphi 0, %s36
    %s51 = sphi 0, %s37
    %s55 = sphi 0, %s55
    %s57 = sphi 0, %s55
    %s58 = sphi 0, %s57
    %s72 = sphi 0, %s58
    %s76 = sphi 0, %s76
    %s78 = sphi 0, %s76
    %s79 = sphi 0, %s78
    %s93 = sphi 0, %s79
    %s97 = sphi 0, %s97
    %s99 = sphi 0, %s97
    %s100 = sphi 0, %s99
    %s114 = sphi 0, %s100
    %s118 = sphi 0, %s118
    %s120 = sphi 0, %s118
    %s121 = sphi 0, %s120
    %s135 = sphi 0, %s121
    %s139 = sphi 0, %s139
    %s141 = sphi 0, %s139
    %s142 = sphi 0, %s141
    %s156 = sphi 0, %s142
    %s160 = sphi 0, %s160
    %s162 = sphi 0, %s160
    %s163 = sphi 0, %s162
    %s177 = sphi 0, %s163
    %s181 = sphi 0, %s181
    %s183 = sphi 0, %s181
    %s184 = sphi 0, %s183
    %s198 = sphi 0, %s184
    %s206 = sphi 0, %s208
    %s209 = sphi 0, %s206
    %s210 = sphi 0, %s209
    %s226 = sphi 0, %s210
  $region4: #{model_forward.1} parent=0 // loop_header_branch
    %17 = sbr.rel (%p15) target = $region8
  $region5: #{model_forward.1} parent=0 // loop_body
    %s19 = ssub.s32 %s14, 1
    %s20 = ssub.s32 %s14, 2
    %s27 = sadd.s32 1, %s22
    %p28 = scmp.ge.s32.totalorder %s27, 1
    %s29 = scalar_select %p28, 0, %s27
    %s30 = sadd.s32 1, %s21
    %s31 = scalar_select %p28, %s30, %s21
    %p32 = scmp.ge.s32.totalorder %s31, 2
    %s33 = scalar_select %p32, 0, %s31
    %s35 = sadd.s32 %s34, 1
    %p38 = scmp.eq.s32.totalorder %s14, 1
    %p39 = scmp.ne.s32.totalorder %s34, %s36
    %p40 = scmp.eq.s32.totalorder %s14, 0
    %p41 = por %p39, %p40
    %p42 = scmp.ne.s32.totalorder %s34, %s36
    %p43 = scmp.eq.s32.totalorder %s19, 1
    %p44 = por %p42, %p43
    %p45 = scmp.ne.s32.totalorder %s36, %s37
    %p46 = scmp.eq.s32.totalorder %s19, 0
    %p47 = por %p45, %p46
    %p48 = scmp.ne.s32.totalorder %s36, %s37
    %p49 = scmp.eq.s32.totalorder %s20, 1
    %p50 = por %p48, %p49
    %p52 = scmp.ne.s32.totalorder %s37, %s51
    %p53 = scmp.eq.s32.totalorder %s20, 0
    %p54 = por %p52, %p53
    %s56 = sadd.s32 %s55, 1
    %p59 = scmp.eq.s32.totalorder %s14, 1
    %p60 = scmp.ne.s32.totalorder %s55, %s57
    %p61 = scmp.eq.s32.totalorder %s14, 0
    %p62 = por %p60, %p61
    %p63 = scmp.ne.s32.totalorder %s55, %s57
    %p64 = scmp.eq.s32.totalorder %s19, 1
    %p65 = por %p63, %p64
    %p66 = scmp.ne.s32.totalorder %s57, %s58
    %p67 = scmp.eq.s32.totalorder %s19, 0
    %p68 = por %p66, %p67
    %p69 = scmp.ne.s32.totalorder %s57, %s58
    %p70 = scmp.eq.s32.totalorder %s20, 1
    %p71 = por %p69, %p70
    %p73 = scmp.ne.s32.totalorder %s58, %s72
    %p74 = scmp.eq.s32.totalorder %s20, 0
    %p75 = por %p73, %p74
    %s77 = sadd.s32 %s76, 1
    %p80 = scmp.eq.s32.totalorder %s14, 1
    %p81 = scmp.ne.s32.totalorder %s76, %s78
    %p82 = scmp.eq.s32.totalorder %s14, 0
    %p83 = por %p81, %p82
    %p84 = scmp.ne.s32.totalorder %s76, %s78
    %p85 = scmp.eq.s32.totalorder %s19, 1
    %p86 = por %p84, %p85
    %p87 = scmp.ne.s32.totalorder %s78, %s79
    %p88 = scmp.eq.s32.totalorder %s19, 0
    %p89 = por %p87, %p88
    %p90 = scmp.ne.s32.totalorder %s78, %s79
    %p91 = scmp.eq.s32.totalorder %s20, 1
    %p92 = por %p90, %p91
    %p94 = scmp.ne.s32.totalorder %s79, %s93
    %p95 = scmp.eq.s32.totalorder %s20, 0
    %p96 = por %p94, %p95
    %s98 = sadd.s32 %s97, 1
    %p101 = scmp.eq.s32.totalorder %s14, 1
    %p102 = scmp.ne.s32.totalorder %s97, %s99
    %p103 = scmp.eq.s32.totalorder %s14, 0
    %p104 = por %p102, %p103
    %p105 = scmp.ne.s32.totalorder %s97, %s99
    %p106 = scmp.eq.s32.totalorder %s19, 1
    %p107 = por %p105, %p106
    %p108 = scmp.ne.s32.totalorder %s99, %s100
    %p109 = scmp.eq.s32.totalorder %s19, 0
    %p110 = por %p108, %p109
    %p111 = scmp.ne.s32.totalorder %s99, %s100
    %p112 = scmp.eq.s32.totalorder %s20, 1
    %p113 = por %p111, %p112
    %p115 = scmp.ne.s32.totalorder %s100, %s114
    %p116 = scmp.eq.s32.totalorder %s20, 0
    %p117 = por %p115, %p116
    %s119 = sadd.s32 %s118, 1
    %p122 = scmp.eq.s32.totalorder %s14, 1
    %p123 = scmp.ne.s32.totalorder %s118, %s120
    %p124 = scmp.eq.s32.totalorder %s14, 0
    %p125 = por %p123, %p124
    %p126 = scmp.ne.s32.totalorder %s118, %s120
    %p127 = scmp.eq.s32.totalorder %s19, 1
    %p128 = por %p126, %p127
    %p129 = scmp.ne.s32.totalorder %s120, %s121
    %p130 = scmp.eq.s32.totalorder %s19, 0
    %p131 = por %p129, %p130
    %p132 = scmp.ne.s32.totalorder %s120, %s121
    %p133 = scmp.eq.s32.totalorder %s20, 1
    %p134 = por %p132, %p133
    %p136 = scmp.ne.s32.totalorder %s121, %s135
    %p137 = scmp.eq.s32.totalorder %s20, 0
    %p138 = por %p136, %p137
    %s140 = sadd.s32 %s139, 1
    %p143 = scmp.eq.s32.totalorder %s14, 1
    %p144 = scmp.ne.s32.totalorder %s139, %s141
    %p145 = scmp.eq.s32.totalorder %s14, 0
    %p146 = por %p144, %p145
    %p147 = scmp.ne.s32.totalorder %s139, %s141
    %p148 = scmp.eq.s32.totalorder %s19, 1
    %p149 = por %p147, %p148
    %p150 = scmp.ne.s32.totalorder %s141, %s142
    %p151 = scmp.eq.s32.totalorder %s19, 0
    %p152 = por %p150, %p151
    %p153 = scmp.ne.s32.totalorder %s141, %s142
    %p154 = scmp.eq.s32.totalorder %s20, 1
    %p155 = por %p153, %p154
    %p157 = scmp.ne.s32.totalorder %s142, %s156
    %p158 = scmp.eq.s32.totalorder %s20, 0
    %p159 = por %p157, %p158
    %s161 = sadd.s32 %s160, 1
    %p164 = scmp.eq.s32.totalorder %s14, 1
    %p165 = scmp.ne.s32.totalorder %s160, %s162
    %p166 = scmp.eq.s32.totalorder %s14, 0
    %p167 = por %p165, %p166
    %p168 = scmp.ne.s32.totalorder %s160, %s162
    %p169 = scmp.eq.s32.totalorder %s19, 1
    %p170 = por %p168, %p169
    %p171 = scmp.ne.s32.totalorder %s162, %s163
    %p172 = scmp.eq.s32.totalorder %s19, 0
    %p173 = por %p171, %p172
    %p174 = scmp.ne.s32.totalorder %s162, %s163
    %p175 = scmp.eq.s32.totalorder %s20, 1
    %p176 = por %p174, %p175
    %p178 = scmp.ne.s32.totalorder %s163, %s177
    %p179 = scmp.eq.s32.totalorder %s20, 0
    %p180 = por %p178, %p179
    %s182 = sadd.s32 %s181, 1
    %p185 = scmp.eq.s32.totalorder %s14, 1
    %p186 = scmp.ne.s32.totalorder %s181, %s183
    %p187 = scmp.eq.s32.totalorder %s14, 0
    %p188 = por %p186, %p187
    %p189 = scmp.ne.s32.totalorder %s181, %s183
    %p190 = scmp.eq.s32.totalorder %s19, 1
    %p191 = por %p189, %p190
    %p192 = scmp.ne.s32.totalorder %s183, %s184
    %p193 = scmp.eq.s32.totalorder %s19, 0
    %p194 = por %p192, %p193
    %p195 = scmp.ne.s32.totalorder %s183, %s184
    %p196 = scmp.eq.s32.totalorder %s20, 1
    %p197 = por %p195, %p196
    %p199 = scmp.ne.s32.totalorder %s184, %s198
    %p200 = scmp.eq.s32.totalorder %s20, 0
    %p201 = por %p199, %p200
    %s202 = smul.u32 %s22, %s21
    %s203 = smul.u32 %s29, %s33
    %s204 = ssub.s32 %s202, %s203
    %p205 = scmp.eq.s32.totalorder %s204, 0
    %s207 = sadd.s32 %s206, 1
    %s208 = scalar_select %p205, %s206, %s207
    %p211 = pneg %p205
    %p212 = scmp.eq.s32.totalorder %s14, 1
    %p213 = por %p211, %p212
    %p214 = scmp.ne.s32.totalorder %s206, %s209
    %p215 = scmp.eq.s32.totalorder %s14, 0
    %p216 = por %p214, %p215
    %p217 = scmp.ne.s32.totalorder %s206, %s209
    %p218 = scmp.eq.s32.totalorder %s19, 1
    %p219 = por %p217, %p218
    %p220 = scmp.ne.s32.totalorder %s209, %s210
    %p221 = scmp.eq.s32.totalorder %s19, 0
    %p222 = por %p220, %p221
    %p223 = scmp.ne.s32.totalorder %s209, %s210
    %p224 = scmp.eq.s32.totalorder %s20, 1
    %p225 = por %p223, %p224
    %p227 = scmp.ne.s32.totalorder %s210, %s226
    %p228 = scmp.eq.s32.totalorder %s20, 0
    %p229 = por %p227, %p228
    %p230 = scmp.le.s32.totalorder 1, %s14
    %p231 = scmp.lt.s32.totalorder %s14, 3
    %p232 = pnand %p230, %p231
    %p233 = pneg %p232
    // Predicated region
    $region9: #{model_forward.1} parent=5 // pred_check
      _
    $region10: #{model_forward.1} parent=5 // pred_check_branch
      %235 = sbr.rel (%p232) target = $region12
    $region11: #{model_forward.1} parent=5 // pred_region
      %s236 = ssub.s32 %s14, 1
      // Predicated region
      $region13: #{model_forward.1} parent=11 // pred_check
        %p237 = pneg %p47
      $region14: #{model_forward.1} parent=11 // pred_check_branch
        %239 = sbr.rel (%p237) target = $region16
      $region15: #{model_forward.1} parent=11 // pred_region
        _
      $region16: #{model_forward.1} parent=11 // pred_fallthru
        _
      // Predicated region
      $region17: #{model_forward.1} parent=11 // pred_check
        %p240 = pneg %p68
      $region18: #{model_forward.1} parent=11 // pred_check_branch
        %242 = sbr.rel (%p240) target = $region20
      $region19: #{model_forward.1} parent=11 // pred_region
        _
      $region20: #{model_forward.1} parent=11 // pred_fallthru
        _
      // Predicated region
      $region21: #{model_forward.1} parent=11 // pred_check
        %p243 = pneg %p89
      $region22: #{model_forward.1} parent=11 // pred_check_branch
        %245 = sbr.rel (%p243) target = $region24
      $region23: #{model_forward.1} parent=11 // pred_region
        _
      $region24: #{model_forward.1} parent=11 // pred_fallthru
        _
      // Predicated region
      $region25: #{model_forward.1} parent=11 // pred_check
        %p246 = pneg %p110
      $region26: #{model_forward.1} parent=11 // pred_check_branch
        %248 = sbr.rel (%p246) target = $region28
      $region27: #{model_forward.1} parent=11 // pred_region
        _
      $region28: #{model_forward.1} parent=11 // pred_fallthru
        _
      // Predicated region
      $region29: #{model_forward.1} parent=11 // pred_check
        %p249 = pneg %p131
      $region30: #{model_forward.1} parent=11 // pred_check_branch
        %251 = sbr.rel (%p249) target = $region32
      $region31: #{model_forward.1} parent=11 // pred_region
        _
      $region32: #{model_forward.1} parent=11 // pred_fallthru
        _
      // Predicated region
      $region33: #{model_forward.1} parent=11 // pred_check
        %p252 = pneg %p152
      $region34: #{model_forward.1} parent=11 // pred_check_branch
        %254 = sbr.rel (%p252) target = $region36
      $region35: #{model_forward.1} parent=11 // pred_region
        _
      $region36: #{model_forward.1} parent=11 // pred_fallthru
        _
      // Predicated region
      $region37: #{model_forward.1} parent=11 // pred_check
        %p255 = pneg %p173
      $region38: #{model_forward.1} parent=11 // pred_check_branch
        %257 = sbr.rel (%p255) target = $region40
      $region39: #{model_forward.1} parent=11 // pred_region
        _
      $region40: #{model_forward.1} parent=11 // pred_fallthru
        _
      // Predicated region
      $region41: #{model_forward.1} parent=11 // pred_check
        %p258 = pneg %p194
      $region42: #{model_forward.1} parent=11 // pred_check_branch
        %260 = sbr.rel (%p258) target = $region44
      $region43: #{model_forward.1} parent=11 // pred_region
        _
      $region44: #{model_forward.1} parent=11 // pred_fallthru
        _
    $region12: #{model_forward.1} parent=5 // pred_fallthru
      _
    %p261 = scmp.lt.s32.totalorder %s14, 2
    // Predicated region
    $region45: #{model_forward.1} parent=5 // pred_check
      %p262 = pneg %p261
    $region46: #{model_forward.1} parent=5 // pred_check_branch
      %264 = sbr.rel (%p262) target = $region48
    $region47: #{model_forward.1} parent=5 // pred_region
      _
    $region48: #{model_forward.1} parent=5 // pred_fallthru
      _
    %p265 = scmp.le.s32.totalorder 1, %s14
    %p266 = scmp.lt.s32.totalorder %s14, 3
    %p267 = pnand %p265, %p266
    %p268 = pneg %p267
    // Predicated region
    $region49: #{model_forward.1} parent=5 // pred_check
      _
    $region50: #{model_forward.1} parent=5 // pred_check_branch
      %270 = sbr.rel (%p267) target = $region52
    $region51: #{model_forward.1} parent=5 // pred_region
      %s271 = ssub.s32 %s14, 1
      %p272 = pneg %p47
      %p273 = pneg %p44
      %p274 = pneg %p68
      %p275 = pneg %p65
      %p276 = pneg %p89
      %p277 = pneg %p86
      %p278 = pneg %p110
      %p279 = pneg %p107
      %p280 = pneg %p131
      %p281 = pneg %p128
      %p282 = pneg %p152
      %p283 = pneg %p149
      %p284 = pneg %p173
      %p285 = pneg %p170
      %p286 = pneg %p194
      %p287 = pneg %p191
      %p288 = pneg %p222
      %p289 = pneg %p219
      %s290 = smul.u32 %s24, %s23
      %s291 = smul.u32 16, %s290
      %p292 = scmp.lt.s32.totalorder %s291, 15
      %s293 = scalar_select %p292, %s291, 15
      %s294 = smul.addr %s293, 8
      %s295 = scalar_lea.vmem %s8, %s294
      %s296 = smul.u32 %s24, %s23
      %s297 = smul.u32 16, %s296
      %p298 = scmp.lt.s32.totalorder %s297, 15
      %s299 = scalar_select %p298, %s297, 15
      %s300 = smul.addr %s299, 8
      %s301 = scalar_lea.vmem %s8, %s300
      %s302 = smul.u32 %s24, %s23
      %s303 = smul.u32 16, %s302
      %s305 = smul.u32 %s24, 128
      %s306 = sshra.s32 %s305, 5
      %s307 = sand.u32 %s305, 31
      %s308 = smul.addr %s306, 8
      %s309 = scalar_lea.vmem %s0, %s308
      %v310 = vld [vmem:[%s309] sm:$0xff]
      %v311 = vld [vmem:[%s309 + $0x8] sm:$0xff]
      %v312 = vld [vmem:[%s309 + $0x10] sm:$0xff]
      %v313 = vld [vmem:[%s309 + $0x18] sm:$0xff]
      %v314 = vunpack.c.l.s8.bf16 %v310
      %v315 = vunpack.c.h.s8.bf16 %v310
      %v316 = vunpack.c.l.s8.bf16 %v311
      %v317 = vunpack.c.h.s8.bf16 %v311
      %v318 = vunpack.c.l.s8.bf16 %v312
      %v319 = vunpack.c.h.s8.bf16 %v312
      %v320 = vunpack.c.l.s8.bf16 %v313
      %v321 = vunpack.c.h.s8.bf16 %v313
      %p322 = scmp.eq.s32.totalorder %s23, 0
      // Predicated region
      $region53: #{model_forward.1} parent=51 // pred_check
        %p323 = pneg %p322
      $region54: #{model_forward.1} parent=51 // pred_check_branch
        %325 = sbr.rel (%p323) target = $region56
      $region55: #{model_forward.1} parent=51 // pred_region
        %v326 = vld [vmem:[%s1] sm:$0xf]
        %v327 = vld [vmem:[%s1 + $0x4] sm:$0xf]
        %v328 = vld [vmem:[%s1 + $0x8] sm:$0xf]
        %v329 = vld [vmem:[%s1 + $0xc] sm:$0xf]
        %v330 = vld [vmem:[%s1 + $0x10] sm:$0xf]
        %v331 = vld [vmem:[%s1 + $0x14] sm:$0xf]
        %v332 = vld [vmem:[%s1 + $0x18] sm:$0xf]
        %v333 = vld [vmem:[%s1 + $0x1c] sm:$0xf]
        %v334 = vld [vmem:[%s1 + $0x20] sm:$0xf]
        %v335 = vld [vmem:[%s1 + $0x24] sm:$0xf]
        %v336 = vld [vmem:[%s1 + $0x28] sm:$0xf]
        %v337 = vld [vmem:[%s1 + $0x2c] sm:$0xf]
        %v338 = vld [vmem:[%s1 + $0x30] sm:$0xf]
        %v339 = vld [vmem:[%s1 + $0x34] sm:$0xf]
        %v340 = vld [vmem:[%s1 + $0x38] sm:$0xf]
        %v341 = vld [vmem:[%s1 + $0x3c] sm:$0xf]
        %v358 = vunpack.c.l.b16 %v326
        %v359 = vunpack.c.l.b16 %v327
        %v360 = vunpack.c.l.b16 %v328
        %v361 = vunpack.c.l.b16 %v329
        %v362 = vunpack.c.l.b16 %v330
        %v363 = vunpack.c.l.b16 %v331
        %v364 = vunpack.c.l.b16 %v332
        %v365 = vunpack.c.l.b16 %v333
        %v366 = vunpack.c.l.b16 %v334
        %v367 = vunpack.c.l.b16 %v335
        %v368 = vunpack.c.l.b16 %v336
        %v369 = vunpack.c.l.b16 %v337
        %v370 = vunpack.c.l.b16 %v338
        %v371 = vunpack.c.l.b16 %v339
        %v372 = vunpack.c.l.b16 %v340
        %v373 = vunpack.c.l.b16 %v341
        %v374 = vpack.c.b16 %v359, %v358
        %v375 = vpack.c.b16 %v361, %v360
        %v376 = vpack.c.b16 %v363, %v362
        %v377 = vpack.c.b16 %v365, %v364
        %v378 = vpack.c.b16 %v367, %v366
        %v379 = vpack.c.b16 %v369, %v368
        %v380 = vpack.c.b16 %v371, %v370
        %v381 = vpack.c.b16 %v373, %v372
        %390 = vmatprep.subr.bf16.mxu0 0
        %391 = vmatpush1.bf16.msra.mxu0 %v381
        %392 = vmatprep.subr.bf16.mxu0 0
        %393 = vmatpush1.bf16.msra.mxu0 %v380
        %394 = vmatprep.subr.bf16.mxu0 0
        %395 = vmatpush1.bf16.msra.mxu0 %v379
        %396 = vmatprep.subr.bf16.mxu0 0
        %397 = vmatpush1.bf16.msra.mxu0 %v378
        %398 = vmatprep.subr.bf16.mxu0 0
        %399 = vmatpush1.bf16.msra.mxu0 %v377
        %400 = vmatprep.subr.bf16.mxu0 0
        %401 = vmatpush1.bf16.msra.mxu0 %v376
        %402 = vmatprep.subr.bf16.mxu0 0
        %403 = vmatpush1.bf16.msra.mxu0 %v375
        %404 = vmatprep.subr.bf16.mxu0 0
        %405 = vmatpush1.bf16.msra.mxu0 %v374
        %406 = vmatprep.subr.bf16.mxu0 0
        %407 = vmatpush2.bf16.msra.mxu0 0
        %408 = vmatprep.subr.bf16.mxu0 0
        %409 = vmatpush2.bf16.msra.mxu0 0
        %410 = vmatprep.subr.bf16.mxu0 0
        %411 = vmatpush2.bf16.msra.mxu0 0
        %412 = vmatprep.subr.bf16.mxu0 0
        %413 = vmatpush2.bf16.msra.mxu0 0
        %414 = vmatprep.subr.bf16.mxu0 0
        %415 = vmatpush2.bf16.msra.mxu0 0
        %416 = vmatprep.subr.bf16.mxu0 0
        %417 = vmatpush2.bf16.msra.mxu0 0
        %418 = vmatprep.subr.bf16.mxu0 0
        %419 = vmatpush2.bf16.msra.mxu0 0
        %420 = vmatprep.subr.bf16.mxu0 0
        %421 = vmatpush2.bf16.msra.mxu0 0
        %422 = vmatprep.mubr.bf16.mxu0 0
        %423 = vmatmul.mubr.bf16.gmra.mxu0 %v314
        %v424 = vpop.f32.mrf.mxu0
        %v425 = vadd.f32 0.0, %v424
        %v426 = vpop.f32.mrf.mxu0
        %v427 = vpop.f32.mrf.mxu0
        %v428 = vadd.f32 0.0, %v427
        %v429 = vpop.f32.mrf.mxu0
        %430 = vmatprep.mubr.bf16.mxu0 0
        %431 = vmatmul.mubr.bf16.gmra.mxu0 %v315
        %v432 = vpop.f32.mrf.mxu0
        %v433 = vadd.f32 0.0, %v432
        %v434 = vpop.f32.mrf.mxu0
        %v435 = vpop.f32.mrf.mxu0
        %v436 = vadd.f32 0.0, %v435
        %v437 = vpop.f32.mrf.mxu0
        %438 = vmatprep.mubr.bf16.mxu0 0
        %439 = vmatmul.mubr.bf16.gmra.mxu0 %v316
        %v440 = vpop.f32.mrf.mxu0
        %v441 = vadd.f32 0.0, %v440
        %v442 = vpop.f32.mrf.mxu0
        %v443 = vpop.f32.mrf.mxu0
        %v444 = vadd.f32 0.0, %v443
        %v445 = vpop.f32.mrf.mxu0
        %446 = vmatprep.mubr.bf16.mxu0 0
        %447 = vmatmul.mubr.bf16.gmra.mxu0 %v317
        %v448 = vpop.f32.mrf.mxu0
        %v449 = vadd.f32 0.0, %v448
        %v450 = vpop.f32.mrf.mxu0
        %v451 = vpop.f32.mrf.mxu0
        %v452 = vadd.f32 0.0, %v451
        %v453 = vpop.f32.mrf.mxu0
        %454 = vmatprep.mubr.bf16.mxu0 0
        %455 = vmatmul.mubr.bf16.gmra.mxu0 %v318
        %v456 = vpop.f32.mrf.mxu0
        %v457 = vadd.f32 0.0, %v456
        %v458 = vpop.f32.mrf.mxu0
        %v459 = vpop.f32.mrf.mxu0
        %v460 = vadd.f32 0.0, %v459
        %v461 = vpop.f32.mrf.mxu0
        %462 = vmatprep.mubr.bf16.mxu0 0
        %463 = vmatmul.mubr.bf16.gmra.mxu0 %v319
        %v464 = vpop.f32.mrf.mxu0
        %v465 = vadd.f32 0.0, %v464
        %v466 = vpop.f32.mrf.mxu0
        %v467 = vpop.f32.mrf.mxu0
        %v468 = vadd.f32 0.0, %v467
        %v469 = vpop.f32.mrf.mxu0
        %470 = vmatprep.mubr.bf16.mxu0 0
        %471 = vmatmul.mubr.bf16.gmra.mxu0 %v320
        %v472 = vpop.f32.mrf.mxu0
        %v473 = vadd.f32 0.0, %v472
        %v474 = vpop.f32.mrf.mxu0
        %v475 = vpop.f32.mrf.mxu0
        %v476 = vadd.f32 0.0, %v475
        %v477 = vpop.f32.mrf.mxu0
        %478 = vmatprep.mubr.bf16.mxu0 0
        %479 = vmatmul.mubr.bf16.gmra.mxu0 %v321
        %v480 = vpop.f32.mrf.mxu0
        %v481 = vadd.f32 0.0, %v480
        %v482 = vpop.f32.mrf.mxu0
        %v483 = vpop.f32.mrf.mxu0
        %v484 = vadd.f32 0.0, %v483
        %v485 = vpop.f32.mrf.mxu0
        %486 = vdwg.mxu0
        %v487 = vld [vmem:[%s2] sm:$0xff]
        %v488 = vld [vmem:[%s2 + $0x8] sm:$0xff]
        %v489 = vld [vmem:[%s2 + $0x10] sm:$0xff]
        %v490 = vld [vmem:[%s2 + $0x18] sm:$0xff]
        %v491 = vld [vmem:[%s2 + $0x20] sm:$0xff]
        %v492 = vld [vmem:[%s2 + $0x28] sm:$0xff]
        %v493 = vld [vmem:[%s2 + $0x30] sm:$0xff]
        %v494 = vld [vmem:[%s2 + $0x38] sm:$0xff]
        %v495 = vld [vmem:[%s2 + $0x40] sm:$0xff]
        %v496 = vld [vmem:[%s2 + $0x48] sm:$0xff]
        %v497 = vld [vmem:[%s2 + $0x50] sm:$0xff]
        %v498 = vld [vmem:[%s2 + $0x58] sm:$0xff]
        %v499 = vld [vmem:[%s2 + $0x60] sm:$0xff]
        %v500 = vld [vmem:[%s2 + $0x68] sm:$0xff]
        %v501 = vld [vmem:[%s2 + $0x70] sm:$0xff]
        %v502 = vld [vmem:[%s2 + $0x78] sm:$0xff]
        %s503 = sshra.s32 %s305, 3
        %s504 = sand.u32 %s305, 7
        %s505 = smul.addr %s503, 4
        %s506 = scalar_lea.vmem %s1, %s505
        %v507 = vld [vmem:[%s506] sm:$0xf]
        %v508 = vld [vmem:[%s506 + $0x4] sm:$0xf]
        %v509 = vld [vmem:[%s506 + $0x8] sm:$0xf]
        %v510 = vld [vmem:[%s506 + $0xc] sm:$0xf]
        %v511 = vld [vmem:[%s506 + $0x10] sm:$0xf]
        %v512 = vld [vmem:[%s506 + $0x14] sm:$0xf]
        %v513 = vld [vmem:[%s506 + $0x18] sm:$0xf]
        %v514 = vld [vmem:[%s506 + $0x1c] sm:$0xf]
        %v515 = vld [vmem:[%s506 + $0x20] sm:$0xf]
        %v516 = vld [vmem:[%s506 + $0x24] sm:$0xf]
        %v517 = vld [vmem:[%s506 + $0x28] sm:$0xf]
        %v518 = vld [vmem:[%s506 + $0x2c] sm:$0xf]
        %v519 = vld [vmem:[%s506 + $0x30] sm:$0xf]
        %v520 = vld [vmem:[%s506 + $0x34] sm:$0xf]
        %v521 = vld [vmem:[%s506 + $0x38] sm:$0xf]
        %v522 = vld [vmem:[%s506 + $0x3c] sm:$0xf]
        %v523 = vunpack.c.l.bf16 %v507
        %v524 = vunpack.c.l.bf16 %v508
        %v525 = vunpack.c.l.bf16 %v509
        %v526 = vunpack.c.l.bf16 %v510
        %v527 = vunpack.c.l.bf16 %v511
        %v528 = vunpack.c.l.bf16 %v512
        %v529 = vunpack.c.l.bf16 %v513
        %v530 = vunpack.c.l.bf16 %v514
        %v531 = vunpack.c.l.bf16 %v515
        %v532 = vunpack.c.l.bf16 %v516
        %v533 = vunpack.c.l.bf16 %v517
        %v534 = vunpack.c.l.bf16 %v518
        %v535 = vunpack.c.l.bf16 %v519
        %v536 = vunpack.c.l.bf16 %v520
        %v537 = vunpack.c.l.bf16 %v521
        %v538 = vunpack.c.l.bf16 %v522
        %v539 = vld [vmem:[%s3] sm:$0xff]
        %v540 = vld [vmem:[%s3 + $0x8] sm:$0xff]
        %v541 = vld [vmem:[%s3 + $0x10] sm:$0xff]
        %v542 = vld [vmem:[%s3 + $0x18] sm:$0xff]
        %v543 = vld [vmem:[%s3 + $0x20] sm:$0xff]
        %v544 = vld [vmem:[%s3 + $0x28] sm:$0xff]
        %v545 = vld [vmem:[%s3 + $0x30] sm:$0xff]
        %v546 = vld [vmem:[%s3 + $0x38] sm:$0xff]
        %v547 = vld [vmem:[%s3 + $0x40] sm:$0xff]
        %v548 = vld [vmem:[%s3 + $0x48] sm:$0xff]
        %v549 = vld [vmem:[%s3 + $0x50] sm:$0xff]
        %v550 = vld [vmem:[%s3 + $0x58] sm:$0xff]
        %v551 = vld [vmem:[%s3 + $0x60] sm:$0xff]
        %v552 = vld [vmem:[%s3 + $0x68] sm:$0xff]
        %v553 = vld [vmem:[%s3 + $0x70] sm:$0xff]
        %v554 = vld [vmem:[%s3 + $0x78] sm:$0xff]
        %555 = vmatprep.subr.mxu0 0.0
        %556 = vmatpush1.msra.mxu0 %v554
        %557 = vmatprep.subr.mxu0 0.0
        %558 = vmatpush1.msra.mxu0 %v553
        %559 = vmatprep.subr.mxu0 0.0
        %560 = vmatpush1.msra.mxu0 %v552
        %561 = vmatprep.subr.mxu0 0.0
        %562 = vmatpush1.msra.mxu0 %v551
        %563 = vmatprep.subr.mxu0 0.0
        %564 = vmatpush1.msra.mxu0 %v550
        %565 = vmatprep.subr.mxu0 0.0
        %566 = vmatpush1.msra.mxu0 %v549
        %567 = vmatprep.subr.mxu0 0.0
        %568 = vmatpush1.msra.mxu0 %v548
        %569 = vmatprep.subr.mxu0 0.0
        %570 = vmatpush1.msra.mxu0 %v547
        %571 = vmatprep.subr.mxu0 0.0
        %572 = vmatpush1.msra.mxu0 %v546
        %573 = vmatprep.subr.mxu0 0.0
        %574 = vmatpush1.msra.mxu0 %v545
        %575 = vmatprep.subr.mxu0 0.0
        %576 = vmatpush1.msra.mxu0 %v544
        %577 = vmatprep.subr.mxu0 0.0
        %578 = vmatpush1.msra.mxu0 %v543
        %579 = vmatprep.subr.mxu0 0.0
        %580 = vmatpush1.msra.mxu0 %v542
        %581 = vmatprep.subr.mxu0 0.0
        %582 = vmatpush1.msra.mxu0 %v541
        %583 = vmatprep.subr.mxu0 0.0
        %584 = vmatpush1.msra.mxu0 %v540
        %585 = vmatprep.subr.mxu0 0.0
        %586 = vmatpush1.msra.mxu0 %v539
        %587 = vmatprep.subr.mxu0 0.0
        %588 = vmatpush2.msra.mxu0 0.0
        %589 = vmatprep.subr.mxu0 0.0
        %590 = vmatpush2.msra.mxu0 0.0
        %591 = vmatprep.subr.mxu0 0.0
        %592 = vmatpush2.msra.mxu0 0.0
        %593 = vmatprep.subr.mxu0 0.0
        %594 = vmatpush2.msra.mxu0 0.0
        %595 = vmatprep.subr.mxu0 0.0
        %596 = vmatpush2.msra.mxu0 0.0
        %597 = vmatprep.subr.mxu0 0.0
        %598 = vmatpush2.msra.mxu0 0.0
        %599 = vmatprep.subr.mxu0 0.0
        %600 = vmatpush2.msra.mxu0 0.0
        %601 = vmatprep.subr.mxu0 0.0
        %602 = vmatpush2.msra.mxu0 0.0
        %603 = vmatprep.subr.mxu0 0.0
        %604 = vmatpush2.msra.mxu0 0.0
        %605 = vmatprep.subr.mxu0 0.0
        %606 = vmatpush2.msra.mxu0 0.0
        %607 = vmatprep.subr.mxu0 0.0
        %608 = vmatpush2.msra.mxu0 0.0
        %609 = vmatprep.subr.mxu0 0.0
        %610 = vmatpush2.msra.mxu0 0.0
        %611 = vmatprep.subr.mxu0 0.0
        %612 = vmatpush2.msra.mxu0 0.0
        %613 = vmatprep.subr.mxu0 0.0
        %614 = vmatpush2.msra.mxu0 0.0
        %615 = vmatprep.subr.mxu0 0.0
        %616 = vmatpush2.msra.mxu0 0.0
        %617 = vmatprep.subr.mxu0 0.0
        %618 = vmatpush2.msra.mxu0 0.0
        %619 = vmatprep.mubr.f32.mxu0 0.0
        %620 = vmatmul.mubr.f32.gmra.mxu0 %v523
        %v621 = vpop.f32.mrf.mxu0
        %v622 = vadd.f32 0.0, %v621
        %v623 = vpop.f32.mrf.mxu0
        %624 = vmatprep.mubr.f32.mxu0 0.0
        %625 = vmatmul.mubr.f32.gmra.mxu0 %v524
        %v626 = vpop.f32.mrf.mxu0
        %v627 = vadd.f32 0.0, %v626
        %v628 = vpop.f32.mrf.mxu0
        %629 = vmatprep.mubr.f32.mxu0 0.0
        %630 = vmatmul.mubr.f32.gmra.mxu0 %v525
        %v631 = vpop.f32.mrf.mxu0
        %v632 = vadd.f32 0.0, %v631
        %v633 = vpop.f32.mrf.mxu0
        %634 = vmatprep.mubr.f32.mxu0 0.0
        %635 = vmatmul.mubr.f32.gmra.mxu0 %v526
        %v636 = vpop.f32.mrf.mxu0
        %v637 = vadd.f32 0.0, %v636
        %v638 = vpop.f32.mrf.mxu0
        %639 = vmatprep.mubr.f32.mxu0 0.0
        %640 = vmatmul.mubr.f32.gmra.mxu0 %v527
        %v641 = vpop.f32.mrf.mxu0
        %v642 = vadd.f32 0.0, %v641
        %v643 = vpop.f32.mrf.mxu0
        %644 = vmatprep.mubr.f32.mxu0 0.0
        %645 = vmatmul.mubr.f32.gmra.mxu0 %v528
        %v646 = vpop.f32.mrf.mxu0
        %v647 = vadd.f32 0.0, %v646
        %v648 = vpop.f32.mrf.mxu0
        %649 = vmatprep.mubr.f32.mxu0 0.0
        %650 = vmatmul.mubr.f32.gmra.mxu0 %v529
        %v651 = vpop.f32.mrf.mxu0
        %v652 = vadd.f32 0.0, %v651
        %v653 = vpop.f32.mrf.mxu0
        %654 = vmatprep.mubr.f32.mxu0 0.0
        %655 = vmatmul.mubr.f32.gmra.mxu0 %v530
        %v656 = vpop.f32.mrf.mxu0
        %v657 = vadd.f32 0.0, %v656
        %v658 = vpop.f32.mrf.mxu0
        %659 = vmatprep.mubr.f32.mxu0 0.0
        %660 = vmatmul.mubr.f32.gmra.mxu0 %v531
        %v661 = vpop.f32.mrf.mxu0
        %v662 = vadd.f32 0.0, %v661
        %v663 = vpop.f32.mrf.mxu0
        %664 = vmatprep.mubr.f32.mxu0 0.0
        %665 = vmatmul.mubr.f32.gmra.mxu0 %v532
        %v666 = vpop.f32.mrf.mxu0
        %v667 = vadd.f32 0.0, %v666
        %v668 = vpop.f32.mrf.mxu0
        %669 = vmatprep.mubr.f32.mxu0 0.0
        %670 = vmatmul.mubr.f32.gmra.mxu0 %v533
        %v671 = vpop.f32.mrf.mxu0
        %v672 = vadd.f32 0.0, %v671
        %v673 = vpop.f32.mrf.mxu0
        %674 = vmatprep.mubr.f32.mxu0 0.0
        %675 = vmatmul.mubr.f32.gmra.mxu0 %v534
        %v676 = vpop.f32.mrf.mxu0
        %v677 = vadd.f32 0.0, %v676
        %v678 = vpop.f32.mrf.mxu0
        %679 = vmatprep.mubr.f32.mxu0 0.0
        %680 = vmatmul.mubr.f32.gmra.mxu0 %v535
        %v681 = vpop.f32.mrf.mxu0
        %v682 = vadd.f32 0.0, %v681
        %v683 = vpop.f32.mrf.mxu0
        %684 = vmatprep.mubr.f32.mxu0 0.0
        %685 = vmatmul.mubr.f32.gmra.mxu0 %v536
        %v686 = vpop.f32.mrf.mxu0
        %v687 = vadd.f32 0.0, %v686
        %v688 = vpop.f32.mrf.mxu0
        %689 = vmatprep.mubr.f32.mxu0 0.0
        %690 = vmatmul.mubr.f32.gmra.mxu0 %v537
        %v691 = vpop.f32.mrf.mxu0
        %v692 = vadd.f32 0.0, %v691
        %v693 = vpop.f32.mrf.mxu0
        %694 = vmatprep.mubr.f32.mxu0 0.0
        %695 = vmatmul.mubr.f32.gmra.mxu0 %v538
        %v696 = vpop.f32.mrf.mxu0
        %v697 = vadd.f32 0.0, %v696
        %v698 = vpop.f32.mrf.mxu0
        %699 = vdwg.mxu0
        %700 = vmatprep.subr.mxu0 0.0
        %701 = vmatpush1.msra.mxu0 %v502
        %702 = vmatprep.subr.mxu0 0.0
        %703 = vmatpush1.msra.mxu0 %v501
        %704 = vmatprep.subr.mxu0 0.0
        %705 = vmatpush1.msra.mxu0 %v500
        %706 = vmatprep.subr.mxu0 0.0
        %707 = vmatpush1.msra.mxu0 %v499
        %708 = vmatprep.subr.mxu0 0.0
        %709 = vmatpush1.msra.mxu0 %v498
        %710 = vmatprep.subr.mxu0 0.0
        %711 = vmatpush1.msra.mxu0 %v497
        %712 = vmatprep.subr.mxu0 0.0
        %713 = vmatpush1.msra.mxu0 %v496
        %714 = vmatprep.subr.mxu0 0.0
        %715 = vmatpush1.msra.mxu0 %v495
        %716 = vmatprep.subr.mxu0 0.0
        %717 = vmatpush1.msra.mxu0 %v494
        %718 = vmatprep.subr.mxu0 0.0
        %719 = vmatpush1.msra.mxu0 %v493
        %720 = vmatprep.subr.mxu0 0.0
        %721 = vmatpush1.msra.mxu0 %v492
        %722 = vmatprep.subr.mxu0 0.0
        %723 = vmatpush1.msra.mxu0 %v491
        %724 = vmatprep.subr.mxu0 0.0
        %725 = vmatpush1.msra.mxu0 %v490
        %726 = vmatprep.subr.mxu0 0.0
        %727 = vmatpush1.msra.mxu0 %v489
        %728 = vmatprep.subr.mxu0 0.0
        %729 = vmatpush1.msra.mxu0 %v488
        %730 = vmatprep.subr.mxu0 0.0
        %731 = vmatpush1.msra.mxu0 %v487
        %732 = vmatprep.subr.mxu0 0.0
        %733 = vmatpush2.msra.mxu0 0.0
        %734 = vmatprep.subr.mxu0 0.0
        %735 = vmatpush2.msra.mxu0 0.0
        %736 = vmatprep.subr.mxu0 0.0
        %737 = vmatpush2.msra.mxu0 0.0
        %738 = vmatprep.subr.mxu0 0.0
        %739 = vmatpush2.msra.mxu0 0.0
        %740 = vmatprep.subr.mxu0 0.0
        %741 = vmatpush2.msra.mxu0 0.0
        %742 = vmatprep.subr.mxu0 0.0
        %743 = vmatpush2.msra.mxu0 0.0
        %744 = vmatprep.subr.mxu0 0.0
        %745 = vmatpush2.msra.mxu0 0.0
        %746 = vmatprep.subr.mxu0 0.0
        %747 = vmatpush2.msra.mxu0 0.0
        %748 = vmatprep.subr.mxu0 0.0
        %749 = vmatpush2.msra.mxu0 0.0
        %750 = vmatprep.subr.mxu0 0.0
        %751 = vmatpush2.msra.mxu0 0.0
        %752 = vmatprep.subr.mxu0 0.0
        %753 = vmatpush2.msra.mxu0 0.0
        %754 = vmatprep.subr.mxu0 0.0
        %755 = vmatpush2.msra.mxu0 0.0
        %756 = vmatprep.subr.mxu0 0.0
        %757 = vmatpush2.msra.mxu0 0.0
        %758 = vmatprep.subr.mxu0 0.0
        %759 = vmatpush2.msra.mxu0 0.0
        %760 = vmatprep.subr.mxu0 0.0
        %761 = vmatpush2.msra.mxu0 0.0
        %762 = vmatprep.subr.mxu0 0.0
        %763 = vmatpush2.msra.mxu0 0.0
        %764 = vmatprep.mubr.f32.mxu0 0.0
        %765 = vmatmul.mubr.f32.gmra.mxu0 %v425
        %v766 = vpop.f32.mrf.mxu0
        %v767 = vadd.f32 %v622, %v766
        %v768 = vpop.f32.mrf.mxu0
        %769 = vmatprep.mubr.f32.mxu0 0.0
        %770 = vmatmul.mubr.f32.gmra.mxu0 %v428
        %v771 = vpop.f32.mrf.mxu0
        %v772 = vadd.f32 %v627, %v771
        %v773 = vpop.f32.mrf.mxu0
        %774 = vmatprep.mubr.f32.mxu0 0.0
        %775 = vmatmul.mubr.f32.gmra.mxu0 %v433
        %v776 = vpop.f32.mrf.mxu0
        %v777 = vadd.f32 %v632, %v776
        %v778 = vpop.f32.mrf.mxu0
        %779 = vmatprep.mubr.f32.mxu0 0.0
        %780 = vmatmul.mubr.f32.gmra.mxu0 %v436
        %v781 = vpop.f32.mrf.mxu0
        %v782 = vadd.f32 %v637, %v781
        %v783 = vpop.f32.mrf.mxu0
        %784 = vmatprep.mubr.f32.mxu0 0.0
        %785 = vmatmul.mubr.f32.gmra.mxu0 %v441
        %v786 = vpop.f32.mrf.mxu0
        %v787 = vadd.f32 %v642, %v786
        %v788 = vpop.f32.mrf.mxu0
        %789 = vmatprep.mubr.f32.mxu0 0.0
        %790 = vmatmul.mubr.f32.gmra.mxu0 %v444
        %v791 = vpop.f32.mrf.mxu0
        %v792 = vadd.f32 %v647, %v791
        %v793 = vpop.f32.mrf.mxu0
        %794 = vmatprep.mubr.f32.mxu0 0.0
        %795 = vmatmul.mubr.f32.gmra.mxu0 %v449
        %v796 = vpop.f32.mrf.mxu0
        %v797 = vadd.f32 %v652, %v796
        %v798 = vpop.f32.mrf.mxu0
        %799 = vmatprep.mubr.f32.mxu0 0.0
        %800 = vmatmul.mubr.f32.gmra.mxu0 %v452
        %v801 = vpop.f32.mrf.mxu0
        %v802 = vadd.f32 %v657, %v801
        %v803 = vpop.f32.mrf.mxu0
        %804 = vmatprep.mubr.f32.mxu0 0.0
        %805 = vmatmul.mubr.f32.gmra.mxu0 %v457
        %v806 = vpop.f32.mrf.mxu0
        %v807 = vadd.f32 %v662, %v806
        %v808 = vpop.f32.mrf.mxu0
        %809 = vmatprep.mubr.f32.mxu0 0.0
        %810 = vmatmul.mubr.f32.gmra.mxu0 %v460
        %v811 = vpop.f32.mrf.mxu0
        %v812 = vadd.f32 %v667, %v811
        %v813 = vpop.f32.mrf.mxu0
        %814 = vmatprep.mubr.f32.mxu0 0.0
        %815 = vmatmul.mubr.f32.gmra.mxu0 %v465
        %v816 = vpop.f32.mrf.mxu0
        %v817 = vadd.f32 %v672, %v816
        %v818 = vpop.f32.mrf.mxu0
        %819 = vmatprep.mubr.f32.mxu0 0.0
        %820 = vmatmul.mubr.f32.gmra.mxu0 %v468
        %v821 = vpop.f32.mrf.mxu0
        %v822 = vadd.f32 %v677, %v821
        %v823 = vpop.f32.mrf.mxu0
        %824 = vmatprep.mubr.f32.mxu0 0.0
        %825 = vmatmul.mubr.f32.gmra.mxu0 %v473
        %v826 = vpop.f32.mrf.mxu0
        %v827 = vadd.f32 %v682, %v826
        %v828 = vpop.f32.mrf.mxu0
        %829 = vmatprep.mubr.f32.mxu0 0.0
        %830 = vmatmul.mubr.f32.gmra.mxu0 %v476
        %v831 = vpop.f32.mrf.mxu0
        %v832 = vadd.f32 %v687, %v831
        %v833 = vpop.f32.mrf.mxu0
        %834 = vmatprep.mubr.f32.mxu0 0.0
        %835 = vmatmul.mubr.f32.gmra.mxu0 %v481
        %v836 = vpop.f32.mrf.mxu0
        %v837 = vadd.f32 %v692, %v836
        %v838 = vpop.f32.mrf.mxu0
        %839 = vmatprep.mubr.f32.mxu0 0.0
        %840 = vmatmul.mubr.f32.gmra.mxu0 %v484
        %v841 = vpop.f32.mrf.mxu0
        %v842 = vadd.f32 %v697, %v841
        %v843 = vpop.f32.mrf.mxu0
        %844 = vdwg.mxu0
        %v845 = vld [vmem:[%s4] sm:$0x1]
        %v847 = vlaneseq
        %v848 = vshrl.u32 %v847, 7
        %v849 = vsub.s32 0, %v848
        %v850 = vrot.slane %v845, %v849
        %v852 = vadd.f32 %v767, %v850
        %v853 = vadd.f32 %v772, %v850
        %v854 = vadd.f32 %v777, %v850
        %v855 = vadd.f32 %v782, %v850
        %v856 = vadd.f32 %v787, %v850
        %v857 = vadd.f32 %v792, %v850
        %v858 = vadd.f32 %v797, %v850
        %v859 = vadd.f32 %v802, %v850
        %v860 = vadd.f32 %v807, %v850
        %v861 = vadd.f32 %v812, %v850
        %v862 = vadd.f32 %v817, %v850
        %v863 = vadd.f32 %v822, %v850
        %v864 = vadd.f32 %v827, %v850
        %v865 = vadd.f32 %v832, %v850
        %v866 = vadd.f32 %v837, %v850
        %v867 = vadd.f32 %v842, %v850
        %v868 = vmax.f32 %v852, 0.0
        %v869 = vmax.f32 %v853, 0.0
        %v870 = vmax.f32 %v854, 0.0
        %v871 = vmax.f32 %v855, 0.0
        %v872 = vmax.f32 %v856, 0.0
        %v873 = vmax.f32 %v857, 0.0
        %v874 = vmax.f32 %v858, 0.0
        %v875 = vmax.f32 %v859, 0.0
        %v876 = vmax.f32 %v860, 0.0
        %v877 = vmax.f32 %v861, 0.0
        %v878 = vmax.f32 %v862, 0.0
        %v879 = vmax.f32 %v863, 0.0
        %v880 = vmax.f32 %v864, 0.0
        %v881 = vmax.f32 %v865, 0.0
        %v882 = vmax.f32 %v866, 0.0
        %v883 = vmax.f32 %v867, 0.0
        %v884 = vpack.c.bf16 %v869, %v868
        %v885 = vpack.c.bf16 %v871, %v870
        %v886 = vpack.c.bf16 %v873, %v872
        %v887 = vpack.c.bf16 %v875, %v874
        %v888 = vpack.c.bf16 %v877, %v876
        %v889 = vpack.c.bf16 %v879, %v878
        %v890 = vpack.c.bf16 %v881, %v880
        %v891 = vpack.c.bf16 %v883, %v882
        %v900 = vunpack.c.l.b16 %v884
        %v901 = vunpack.c.h.b16 %v884
        %v902 = vunpack.c.l.b16 %v885
        %v903 = vunpack.c.h.b16 %v885
        %v904 = vunpack.c.l.b16 %v886
        %v905 = vunpack.c.h.b16 %v886
        %v906 = vunpack.c.l.b16 %v887
        %v907 = vunpack.c.h.b16 %v887
        %v908 = vunpack.c.l.b16 %v888
        %v909 = vunpack.c.h.b16 %v888
        %v910 = vunpack.c.l.b16 %v889
        %v911 = vunpack.c.h.b16 %v889
        %v912 = vunpack.c.l.b16 %v890
        %v913 = vunpack.c.h.b16 %v890
        %v914 = vunpack.c.l.b16 %v891
        %v915 = vunpack.c.h.b16 %v891
        %v916 = vpack.c.b16 %v900, %v900
        %v917 = vpack.c.b16 %v901, %v901
        %v918 = vpack.c.b16 %v902, %v902
        %v919 = vpack.c.b16 %v903, %v903
        %v920 = vpack.c.b16 %v904, %v904
        %v921 = vpack.c.b16 %v905, %v905
        %v922 = vpack.c.b16 %v906, %v906
        %v923 = vpack.c.b16 %v907, %v907
        %v924 = vpack.c.b16 %v908, %v908
        %v925 = vpack.c.b16 %v909, %v909
        %v926 = vpack.c.b16 %v910, %v910
        %v927 = vpack.c.b16 %v911, %v911
        %v928 = vpack.c.b16 %v912, %v912
        %v929 = vpack.c.b16 %v913, %v913
        %v930 = vpack.c.b16 %v914, %v914
        %v931 = vpack.c.b16 %v915, %v915
        %s948 = smul.addr %s503, 4
        %s949 = scalar_lea.vmem [#allocation2], %s948
        %950 = vst [vmem:[%s949] sm:$0xf] %v916
        %951 = vst [vmem:[%s949 + $0x4] sm:$0xf] %v917
        %952 = vst [vmem:[%s949 + $0x8] sm:$0xf] %v918
        %953 = vst [vmem:[%s949 + $0xc] sm:$0xf] %v919
        %954 = vst [vmem:[%s949 + $0x10] sm:$0xf] %v920
        %955 = vst [vmem:[%s949 + $0x14] sm:$0xf] %v921
        %956 = vst [vmem:[%s949 + $0x18] sm:$0xf] %v922
        %957 = vst [vmem:[%s949 + $0x1c] sm:$0xf] %v923
        %958 = vst [vmem:[%s949 + $0x20] sm:$0xf] %v924
        %959 = vst [vmem:[%s949 + $0x24] sm:$0xf] %v925
        %960 = vst [vmem:[%s949 + $0x28] sm:$0xf] %v926
        %961 = vst [vmem:[%s949 + $0x2c] sm:$0xf] %v927
        %962 = vst [vmem:[%s949 + $0x30] sm:$0xf] %v928
        %963 = vst [vmem:[%s949 + $0x34] sm:$0xf] %v929
        %964 = vst [vmem:[%s949 + $0x38] sm:$0xf] %v930
        %965 = vst [vmem:[%s949 + $0x3c] sm:$0xf] %v931
      $region56: #{model_forward.1} parent=51 // pred_fallthru
        _
      %p966 = scmp.eq.s32.totalorder %s23, 1
      // Predicated region
      $region57: #{model_forward.1} parent=51 // pred_check
        %p967 = pneg %p966
      $region58: #{model_forward.1} parent=51 // pred_check_branch
        %969 = sbr.rel (%p967) target = $region60
      $region59: #{model_forward.1} parent=51 // pred_region
        %v970 = vld [vmem:[#allocation2] sm:$0xf]
        %v971 = vld [vmem:[#allocation2 + $0x4] sm:$0xf]
        %v972 = vld [vmem:[#allocation2 + $0x8] sm:$0xf]
        %v973 = vld [vmem:[#allocation2 + $0xc] sm:$0xf]
        %v974 = vld [vmem:[#allocation2 + $0x10] sm:$0xf]
        %v975 = vld [vmem:[#allocation2 + $0x14] sm:$0xf]
        %v976 = vld [vmem:[#allocation2 + $0x18] sm:$0xf]
        %v977 = vld [vmem:[#allocation2 + $0x1c] sm:$0xf]
        %v978 = vld [vmem:[#allocation2 + $0x20] sm:$0xf]
        %v979 = vld [vmem:[#allocation2 + $0x24] sm:$0xf]
        %v980 = vld [vmem:[#allocation2 + $0x28] sm:$0xf]
        %v981 = vld [vmem:[#allocation2 + $0x2c] sm:$0xf]
        %v982 = vld [vmem:[#allocation2 + $0x30] sm:$0xf]
        %v983 = vld [vmem:[#allocation2 + $0x34] sm:$0xf]
        %v984 = vld [vmem:[#allocation2 + $0x38] sm:$0xf]
        %v985 = vld [vmem:[#allocation2 + $0x3c] sm:$0xf]
        %v1002 = vunpack.c.l.b16 %v970
        %v1003 = vunpack.c.l.b16 %v971
        %v1004 = vunpack.c.l.b16 %v972
        %v1005 = vunpack.c.l.b16 %v973
        %v1006 = vunpack.c.l.b16 %v974
        %v1007 = vunpack.c.l.b16 %v975
        %v1008 = vunpack.c.l.b16 %v976
        %v1009 = vunpack.c.l.b16 %v977
        %v1010 = vunpack.c.l.b16 %v978
        %v1011 = vunpack.c.l.b16 %v979
        %v1012 = vunpack.c.l.b16 %v980
        %v1013 = vunpack.c.l.b16 %v981
        %v1014 = vunpack.c.l.b16 %v982
        %v1015 = vunpack.c.l.b16 %v983
        %v1016 = vunpack.c.l.b16 %v984
        %v1017 = vunpack.c.l.b16 %v985
        %v1018 = vpack.c.b16 %v1003, %v1002
        %v1019 = vpack.c.b16 %v1005, %v1004
        %v1020 = vpack.c.b16 %v1007, %v1006
        %v1021 = vpack.c.b16 %v1009, %v1008
        %v1022 = vpack.c.b16 %v1011, %v1010
        %v1023 = vpack.c.b16 %v1013, %v1012
        %v1024 = vpack.c.b16 %v1015, %v1014
        %v1025 = vpack.c.b16 %v1017, %v1016
        %1034 = vmatprep.subr.bf16.mxu0 0
        %1035 = vmatpush1.bf16.msra.mxu0 %v1025
        %1036 = vmatprep.subr.bf16.mxu0 0
        %1037 = vmatpush1.bf16.msra.mxu0 %v1024
        %1038 = vmatprep.subr.bf16.mxu0 0
        %1039 = vmatpush1.bf16.msra.mxu0 %v1023
        %1040 = vmatprep.subr.bf16.mxu0 0
        %1041 = vmatpush1.bf16.msra.mxu0 %v1022
        %1042 = vmatprep.subr.bf16.mxu0 0
        %1043 = vmatpush1.bf16.msra.mxu0 %v1021
        %1044 = vmatprep.subr.bf16.mxu0 0
        %1045 = vmatpush1.bf16.msra.mxu0 %v1020
        %1046 = vmatprep.subr.bf16.mxu0 0
        %1047 = vmatpush1.bf16.msra.mxu0 %v1019
        %1048 = vmatprep.subr.bf16.mxu0 0
        %1049 = vmatpush1.bf16.msra.mxu0 %v1018
        %1050 = vmatprep.subr.bf16.mxu0 0
        %1051 = vmatpush2.bf16.msra.mxu0 0
        %1052 = vmatprep.subr.bf16.mxu0 0
        %1053 = vmatpush2.bf16.msra.mxu0 0
        %1054 = vmatprep.subr.bf16.mxu0 0
        %1055 = vmatpush2.bf16.msra.mxu0 0
        %1056 = vmatprep.subr.bf16.mxu0 0
        %1057 = vmatpush2.bf16.msra.mxu0 0
        %1058 = vmatprep.subr.bf16.mxu0 0
        %1059 = vmatpush2.bf16.msra.mxu0 0
        %1060 = vmatprep.subr.bf16.mxu0 0
        %1061 = vmatpush2.bf16.msra.mxu0 0
        %1062 = vmatprep.subr.bf16.mxu0 0
        %1063 = vmatpush2.bf16.msra.mxu0 0
        %1064 = vmatprep.subr.bf16.mxu0 0
        %1065 = vmatpush2.bf16.msra.mxu0 0
        %1066 = vmatprep.mubr.bf16.mxu0 0
        %1067 = vmatmul.mubr.bf16.gmra.mxu0 %v314
        %v1068 = vpop.f32.mrf.mxu0
        %v1069 = vadd.f32 0.0, %v1068
        %v1070 = vpop.f32.mrf.mxu0
        %v1071 = vpop.f32.mrf.mxu0
        %v1072 = vadd.f32 0.0, %v1071
        %v1073 = vpop.f32.mrf.mxu0
        %1074 = vmatprep.mubr.bf16.mxu0 0
        %1075 = vmatmul.mubr.bf16.gmra.mxu0 %v315
        %v1076 = vpop.f32.mrf.mxu0
        %v1077 = vadd.f32 0.0, %v1076
        %v1078 = vpop.f32.mrf.mxu0
        %v1079 = vpop.f32.mrf.mxu0
        %v1080 = vadd.f32 0.0, %v1079
        %v1081 = vpop.f32.mrf.mxu0
        %1082 = vmatprep.mubr.bf16.mxu0 0
        %1083 = vmatmul.mubr.bf16.gmra.mxu0 %v316
        %v1084 = vpop.f32.mrf.mxu0
        %v1085 = vadd.f32 0.0, %v1084
        %v1086 = vpop.f32.mrf.mxu0
        %v1087 = vpop.f32.mrf.mxu0
        %v1088 = vadd.f32 0.0, %v1087
        %v1089 = vpop.f32.mrf.mxu0
        %1090 = vmatprep.mubr.bf16.mxu0 0
        %1091 = vmatmul.mubr.bf16.gmra.mxu0 %v317
        %v1092 = vpop.f32.mrf.mxu0
        %v1093 = vadd.f32 0.0, %v1092
        %v1094 = vpop.f32.mrf.mxu0
        %v1095 = vpop.f32.mrf.mxu0
        %v1096 = vadd.f32 0.0, %v1095
        %v1097 = vpop.f32.mrf.mxu0
        %1098 = vmatprep.mubr.bf16.mxu0 0
        %1099 = vmatmul.mubr.bf16.gmra.mxu0 %v318
        %v1100 = vpop.f32.mrf.mxu0
        %v1101 = vadd.f32 0.0, %v1100
        %v1102 = vpop.f32.mrf.mxu0
        %v1103 = vpop.f32.mrf.mxu0
        %v1104 = vadd.f32 0.0, %v1103
        %v1105 = vpop.f32.mrf.mxu0
        %1106 = vmatprep.mubr.bf16.mxu0 0
        %1107 = vmatmul.mubr.bf16.gmra.mxu0 %v319
        %v1108 = vpop.f32.mrf.mxu0
        %v1109 = vadd.f32 0.0, %v1108
        %v1110 = vpop.f32.mrf.mxu0
        %v1111 = vpop.f32.mrf.mxu0
        %v1112 = vadd.f32 0.0, %v1111
        %v1113 = vpop.f32.mrf.mxu0
        %1114 = vmatprep.mubr.bf16.mxu0 0
        %1115 = vmatmul.mubr.bf16.gmra.mxu0 %v320
        %v1116 = vpop.f32.mrf.mxu0
        %v1117 = vadd.f32 0.0, %v1116
        %v1118 = vpop.f32.mrf.mxu0
        %v1119 = vpop.f32.mrf.mxu0
        %v1120 = vadd.f32 0.0, %v1119
        %v1121 = vpop.f32.mrf.mxu0
        %1122 = vmatprep.mubr.bf16.mxu0 0
        %1123 = vmatmul.mubr.bf16.gmra.mxu0 %v321
        %v1124 = vpop.f32.mrf.mxu0
        %v1125 = vadd.f32 0.0, %v1124
        %v1126 = vpop.f32.mrf.mxu0
        %v1127 = vpop.f32.mrf.mxu0
        %v1128 = vadd.f32 0.0, %v1127
        %v1129 = vpop.f32.mrf.mxu0
        %1130 = vdwg.mxu0
        %v1131 = vld [vmem:[%s5] sm:$0xff]
        %v1132 = vld [vmem:[%s5 + $0x8] sm:$0xff]
        %v1133 = vld [vmem:[%s5 + $0x10] sm:$0xff]
        %v1134 = vld [vmem:[%s5 + $0x18] sm:$0xff]
        %v1135 = vld [vmem:[%s5 + $0x20] sm:$0xff]
        %v1136 = vld [vmem:[%s5 + $0x28] sm:$0xff]
        %v1137 = vld [vmem:[%s5 + $0x30] sm:$0xff]
        %v1138 = vld [vmem:[%s5 + $0x38] sm:$0xff]
        %v1139 = vld [vmem:[%s5 + $0x40] sm:$0xff]
        %v1140 = vld [vmem:[%s5 + $0x48] sm:$0xff]
        %v1141 = vld [vmem:[%s5 + $0x50] sm:$0xff]
        %v1142 = vld [vmem:[%s5 + $0x58] sm:$0xff]
        %v1143 = vld [vmem:[%s5 + $0x60] sm:$0xff]
        %v1144 = vld [vmem:[%s5 + $0x68] sm:$0xff]
        %v1145 = vld [vmem:[%s5 + $0x70] sm:$0xff]
        %v1146 = vld [vmem:[%s5 + $0x78] sm:$0xff]
        %s1147 = sshra.s32 %s305, 3
        %s1148 = sand.u32 %s305, 7
        %s1149 = smul.addr %s1147, 4
        %s1150 = scalar_lea.vmem [#allocation2], %s1149
        %v1151 = vld [vmem:[%s1150] sm:$0xf]
        %v1152 = vld [vmem:[%s1150 + $0x4] sm:$0xf]
        %v1153 = vld [vmem:[%s1150 + $0x8] sm:$0xf]
        %v1154 = vld [vmem:[%s1150 + $0xc] sm:$0xf]
        %v1155 = vld [vmem:[%s1150 + $0x10] sm:$0xf]
        %v1156 = vld [vmem:[%s1150 + $0x14] sm:$0xf]
        %v1157 = vld [vmem:[%s1150 + $0x18] sm:$0xf]
        %v1158 = vld [vmem:[%s1150 + $0x1c] sm:$0xf]
        %v1159 = vld [vmem:[%s1150 + $0x20] sm:$0xf]
        %v1160 = vld [vmem:[%s1150 + $0x24] sm:$0xf]
        %v1161 = vld [vmem:[%s1150 + $0x28] sm:$0xf]
        %v1162 = vld [vmem:[%s1150 + $0x2c] sm:$0xf]
        %v1163 = vld [vmem:[%s1150 + $0x30] sm:$0xf]
        %v1164 = vld [vmem:[%s1150 + $0x34] sm:$0xf]
        %v1165 = vld [vmem:[%s1150 + $0x38] sm:$0xf]
        %v1166 = vld [vmem:[%s1150 + $0x3c] sm:$0xf]
        %v1167 = vunpack.c.l.bf16 %v1151
        %v1168 = vunpack.c.l.bf16 %v1152
        %v1169 = vunpack.c.l.bf16 %v1153
        %v1170 = vunpack.c.l.bf16 %v1154
        %v1171 = vunpack.c.l.bf16 %v1155
        %v1172 = vunpack.c.l.bf16 %v1156
        %v1173 = vunpack.c.l.bf16 %v1157
        %v1174 = vunpack.c.l.bf16 %v1158
        %v1175 = vunpack.c.l.bf16 %v1159
        %v1176 = vunpack.c.l.bf16 %v1160
        %v1177 = vunpack.c.l.bf16 %v1161
        %v1178 = vunpack.c.l.bf16 %v1162
        %v1179 = vunpack.c.l.bf16 %v1163
        %v1180 = vunpack.c.l.bf16 %v1164
        %v1181 = vunpack.c.l.bf16 %v1165
        %v1182 = vunpack.c.l.bf16 %v1166
        %v1183 = vld [vmem:[%s6] sm:$0xff]
        %v1184 = vld [vmem:[%s6 + $0x8] sm:$0xff]
        %v1185 = vld [vmem:[%s6 + $0x10] sm:$0xff]
        %v1186 = vld [vmem:[%s6 + $0x18] sm:$0xff]
        %v1187 = vld [vmem:[%s6 + $0x20] sm:$0xff]
        %v1188 = vld [vmem:[%s6 + $0x28] sm:$0xff]
        %v1189 = vld [vmem:[%s6 + $0x30] sm:$0xff]
        %v1190 = vld [vmem:[%s6 + $0x38] sm:$0xff]
        %v1191 = vld [vmem:[%s6 + $0x40] sm:$0xff]
        %v1192 = vld [vmem:[%s6 + $0x48] sm:$0xff]
        %v1193 = vld [vmem:[%s6 + $0x50] sm:$0xff]
        %v1194 = vld [vmem:[%s6 + $0x58] sm:$0xff]
        %v1195 = vld [vmem:[%s6 + $0x60] sm:$0xff]
        %v1196 = vld [vmem:[%s6 + $0x68] sm:$0xff]
        %v1197 = vld [vmem:[%s6 + $0x70] sm:$0xff]
        %v1198 = vld [vmem:[%s6 + $0x78] sm:$0xff]
        %1199 = vmatprep.subr.mxu0 0.0
        %1200 = vmatpush1.msra.mxu0 %v1198
        %1201 = vmatprep.subr.mxu0 0.0
        %1202 = vmatpush1.msra.mxu0 %v1197
        %1203 = vmatprep.subr.mxu0 0.0
        %1204 = vmatpush1.msra.mxu0 %v1196
        %1205 = vmatprep.subr.mxu0 0.0
        %1206 = vmatpush1.msra.mxu0 %v1195
        %1207 = vmatprep.subr.mxu0 0.0
        %1208 = vmatpush1.msra.mxu0 %v1194
        %1209 = vmatprep.subr.mxu0 0.0
        %1210 = vmatpush1.msra.mxu0 %v1193
        %1211 = vmatprep.subr.mxu0 0.0
        %1212 = vmatpush1.msra.mxu0 %v1192
        %1213 = vmatprep.subr.mxu0 0.0
        %1214 = vmatpush1.msra.mxu0 %v1191
        %1215 = vmatprep.subr.mxu0 0.0
        %1216 = vmatpush1.msra.mxu0 %v1190
        %1217 = vmatprep.subr.mxu0 0.0
        %1218 = vmatpush1.msra.mxu0 %v1189
        %1219 = vmatprep.subr.mxu0 0.0
        %1220 = vmatpush1.msra.mxu0 %v1188
        %1221 = vmatprep.subr.mxu0 0.0
        %1222 = vmatpush1.msra.mxu0 %v1187
        %1223 = vmatprep.subr.mxu0 0.0
        %1224 = vmatpush1.msra.mxu0 %v1186
        %1225 = vmatprep.subr.mxu0 0.0
        %1226 = vmatpush1.msra.mxu0 %v1185
        %1227 = vmatprep.subr.mxu0 0.0
        %1228 = vmatpush1.msra.mxu0 %v1184
        %1229 = vmatprep.subr.mxu0 0.0
        %1230 = vmatpush1.msra.mxu0 %v1183
        %1231 = vmatprep.subr.mxu0 0.0
        %1232 = vmatpush2.msra.mxu0 0.0
        %1233 = vmatprep.subr.mxu0 0.0
        %1234 = vmatpush2.msra.mxu0 0.0
        %1235 = vmatprep.subr.mxu0 0.0
        %1236 = vmatpush2.msra.mxu0 0.0
        %1237 = vmatprep.subr.mxu0 0.0
        %1238 = vmatpush2.msra.mxu0 0.0
        %1239 = vmatprep.subr.mxu0 0.0
        %1240 = vmatpush2.msra.mxu0 0.0
        %1241 = vmatprep.subr.mxu0 0.0
        %1242 = vmatpush2.msra.mxu0 0.0
        %1243 = vmatprep.subr.mxu0 0.0
        %1244 = vmatpush2.msra.mxu0 0.0
        %1245 = vmatprep.subr.mxu0 0.0
        %1246 = vmatpush2.msra.mxu0 0.0
        %1247 = vmatprep.subr.mxu0 0.0
        %1248 = vmatpush2.msra.mxu0 0.0
        %1249 = vmatprep.subr.mxu0 0.0
        %1250 = vmatpush2.msra.mxu0 0.0
        %1251 = vmatprep.subr.mxu0 0.0
        %1252 = vmatpush2.msra.mxu0 0.0
        %1253 = vmatprep.subr.mxu0 0.0
        %1254 = vmatpush2.msra.mxu0 0.0
        %1255 = vmatprep.subr.mxu0 0.0
        %1256 = vmatpush2.msra.mxu0 0.0
        %1257 = vmatprep.subr.mxu0 0.0
        %1258 = vmatpush2.msra.mxu0 0.0
        %1259 = vmatprep.subr.mxu0 0.0
        %1260 = vmatpush2.msra.mxu0 0.0
        %1261 = vmatprep.subr.mxu0 0.0
        %1262 = vmatpush2.msra.mxu0 0.0
        %1263 = vmatprep.mubr.f32.mxu0 0.0
        %1264 = vmatmul.mubr.f32.gmra.mxu0 %v1167
        %v1265 = vpop.f32.mrf.mxu0
        %v1266 = vadd.f32 0.0, %v1265
        %v1267 = vpop.f32.mrf.mxu0
        %1268 = vmatprep.mubr.f32.mxu0 0.0
        %1269 = vmatmul.mubr.f32.gmra.mxu0 %v1168
        %v1270 = vpop.f32.mrf.mxu0
        %v1271 = vadd.f32 0.0, %v1270
        %v1272 = vpop.f32.mrf.mxu0
        %1273 = vmatprep.mubr.f32.mxu0 0.0
        %1274 = vmatmul.mubr.f32.gmra.mxu0 %v1169
        %v1275 = vpop.f32.mrf.mxu0
        %v1276 = vadd.f32 0.0, %v1275
        %v1277 = vpop.f32.mrf.mxu0
        %1278 = vmatprep.mubr.f32.mxu0 0.0
        %1279 = vmatmul.mubr.f32.gmra.mxu0 %v1170
        %v1280 = vpop.f32.mrf.mxu0
        %v1281 = vadd.f32 0.0, %v1280
        %v1282 = vpop.f32.mrf.mxu0
        %1283 = vmatprep.mubr.f32.mxu0 0.0
        %1284 = vmatmul.mubr.f32.gmra.mxu0 %v1171
        %v1285 = vpop.f32.mrf.mxu0
        %v1286 = vadd.f32 0.0, %v1285
        %v1287 = vpop.f32.mrf.mxu0
        %1288 = vmatprep.mubr.f32.mxu0 0.0
        %1289 = vmatmul.mubr.f32.gmra.mxu0 %v1172
        %v1290 = vpop.f32.mrf.mxu0
        %v1291 = vadd.f32 0.0, %v1290
        %v1292 = vpop.f32.mrf.mxu0
        %1293 = vmatprep.mubr.f32.mxu0 0.0
        %1294 = vmatmul.mubr.f32.gmra.mxu0 %v1173
        %v1295 = vpop.f32.mrf.mxu0
        %v1296 = vadd.f32 0.0, %v1295
        %v1297 = vpop.f32.mrf.mxu0
        %1298 = vmatprep.mubr.f32.mxu0 0.0
        %1299 = vmatmul.mubr.f32.gmra.mxu0 %v1174
        %v1300 = vpop.f32.mrf.mxu0
        %v1301 = vadd.f32 0.0, %v1300
        %v1302 = vpop.f32.mrf.mxu0
        %1303 = vmatprep.mubr.f32.mxu0 0.0
        %1304 = vmatmul.mubr.f32.gmra.mxu0 %v1175
        %v1305 = vpop.f32.mrf.mxu0
        %v1306 = vadd.f32 0.0, %v1305
        %v1307 = vpop.f32.mrf.mxu0
        %1308 = vmatprep.mubr.f32.mxu0 0.0
        %1309 = vmatmul.mubr.f32.gmra.mxu0 %v1176
        %v1310 = vpop.f32.mrf.mxu0
        %v1311 = vadd.f32 0.0, %v1310
        %v1312 = vpop.f32.mrf.mxu0
        %1313 = vmatprep.mubr.f32.mxu0 0.0
        %1314 = vmatmul.mubr.f32.gmra.mxu0 %v1177
        %v1315 = vpop.f32.mrf.mxu0
        %v1316 = vadd.f32 0.0, %v1315
        %v1317 = vpop.f32.mrf.mxu0
        %1318 = vmatprep.mubr.f32.mxu0 0.0
        %1319 = vmatmul.mubr.f32.gmra.mxu0 %v1178
        %v1320 = vpop.f32.mrf.mxu0
        %v1321 = vadd.f32 0.0, %v1320
        %v1322 = vpop.f32.mrf.mxu0
        %1323 = vmatprep.mubr.f32.mxu0 0.0
        %1324 = vmatmul.mubr.f32.gmra.mxu0 %v1179
        %v1325 = vpop.f32.mrf.mxu0
        %v1326 = vadd.f32 0.0, %v1325
        %v1327 = vpop.f32.mrf.mxu0
        %1328 = vmatprep.mubr.f32.mxu0 0.0
        %1329 = vmatmul.mubr.f32.gmra.mxu0 %v1180
        %v1330 = vpop.f32.mrf.mxu0
        %v1331 = vadd.f32 0.0, %v1330
        %v1332 = vpop.f32.mrf.mxu0
        %1333 = vmatprep.mubr.f32.mxu0 0.0
        %1334 = vmatmul.mubr.f32.gmra.mxu0 %v1181
        %v1335 = vpop.f32.mrf.mxu0
        %v1336 = vadd.f32 0.0, %v1335
        %v1337 = vpop.f32.mrf.mxu0
        %1338 = vmatprep.mubr.f32.mxu0 0.0
        %1339 = vmatmul.mubr.f32.gmra.mxu0 %v1182
        %v1340 = vpop.f32.mrf.mxu0
        %v1341 = vadd.f32 0.0, %v1340
        %v1342 = vpop.f32.mrf.mxu0
        %1343 = vdwg.mxu0
        %1344 = vmatprep.subr.mxu0 0.0
        %1345 = vmatpush1.msra.mxu0 %v1146
        %1346 = vmatprep.subr.mxu0 0.0
        %1347 = vmatpush1.msra.mxu0 %v1145
        %1348 = vmatprep.subr.mxu0 0.0
        %1349 = vmatpush1.msra.mxu0 %v1144
        %1350 = vmatprep.subr.mxu0 0.0
        %1351 = vmatpush1.msra.mxu0 %v1143
        %1352 = vmatprep.subr.mxu0 0.0
        %1353 = vmatpush1.msra.mxu0 %v1142
        %1354 = vmatprep.subr.mxu0 0.0
        %1355 = vmatpush1.msra.mxu0 %v1141
        %1356 = vmatprep.subr.mxu0 0.0
        %1357 = vmatpush1.msra.mxu0 %v1140
        %1358 = vmatprep.subr.mxu0 0.0
        %1359 = vmatpush1.msra.mxu0 %v1139
        %1360 = vmatprep.subr.mxu0 0.0
        %1361 = vmatpush1.msra.mxu0 %v1138
        %1362 = vmatprep.subr.mxu0 0.0
        %1363 = vmatpush1.msra.mxu0 %v1137
        %1364 = vmatprep.subr.mxu0 0.0
        %1365 = vmatpush1.msra.mxu0 %v1136
        %1366 = vmatprep.subr.mxu0 0.0
        %1367 = vmatpush1.msra.mxu0 %v1135
        %1368 = vmatprep.subr.mxu0 0.0
        %1369 = vmatpush1.msra.mxu0 %v1134
        %1370 = vmatprep.subr.mxu0 0.0
        %1371 = vmatpush1.msra.mxu0 %v1133
        %1372 = vmatprep.subr.mxu0 0.0
        %1373 = vmatpush1.msra.mxu0 %v1132
        %1374 = vmatprep.subr.mxu0 0.0
        %1375 = vmatpush1.msra.mxu0 %v1131
        %1376 = vmatprep.subr.mxu0 0.0
        %1377 = vmatpush2.msra.mxu0 0.0
        %1378 = vmatprep.subr.mxu0 0.0
        %1379 = vmatpush2.msra.mxu0 0.0
        %1380 = vmatprep.subr.mxu0 0.0
        %1381 = vmatpush2.msra.mxu0 0.0
        %1382 = vmatprep.subr.mxu0 0.0
        %1383 = vmatpush2.msra.mxu0 0.0
        %1384 = vmatprep.subr.mxu0 0.0
        %1385 = vmatpush2.msra.mxu0 0.0
        %1386 = vmatprep.subr.mxu0 0.0
        %1387 = vmatpush2.msra.mxu0 0.0
        %1388 = vmatprep.subr.mxu0 0.0
        %1389 = vmatpush2.msra.mxu0 0.0
        %1390 = vmatprep.subr.mxu0 0.0
        %1391 = vmatpush2.msra.mxu0 0.0
        %1392 = vmatprep.subr.mxu0 0.0
        %1393 = vmatpush2.msra.mxu0 0.0
        %1394 = vmatprep.subr.mxu0 0.0
        %1395 = vmatpush2.msra.mxu0 0.0
        %1396 = vmatprep.subr.mxu0 0.0
        %1397 = vmatpush2.msra.mxu0 0.0
        %1398 = vmatprep.subr.mxu0 0.0
        %1399 = vmatpush2.msra.mxu0 0.0
        %1400 = vmatprep.subr.mxu0 0.0
        %1401 = vmatpush2.msra.mxu0 0.0
        %1402 = vmatprep.subr.mxu0 0.0
        %1403 = vmatpush2.msra.mxu0 0.0
        %1404 = vmatprep.subr.mxu0 0.0
        %1405 = vmatpush2.msra.mxu0 0.0
        %1406 = vmatprep.subr.mxu0 0.0
        %1407 = vmatpush2.msra.mxu0 0.0
        %1408 = vmatprep.mubr.f32.mxu0 0.0
        %1409 = vmatmul.mubr.f32.gmra.mxu0 %v1069
        %v1410 = vpop.f32.mrf.mxu0
        %v1411 = vadd.f32 %v1266, %v1410
        %v1412 = vpop.f32.mrf.mxu0
        %1413 = vmatprep.mubr.f32.mxu0 0.0
        %1414 = vmatmul.mubr.f32.gmra.mxu0 %v1072
        %v1415 = vpop.f32.mrf.mxu0
        %v1416 = vadd.f32 %v1271, %v1415
        %v1417 = vpop.f32.mrf.mxu0
        %1418 = vmatprep.mubr.f32.mxu0 0.0
        %1419 = vmatmul.mubr.f32.gmra.mxu0 %v1077
        %v1420 = vpop.f32.mrf.mxu0
        %v1421 = vadd.f32 %v1276, %v1420
        %v1422 = vpop.f32.mrf.mxu0
        %1423 = vmatprep.mubr.f32.mxu0 0.0
        %1424 = vmatmul.mubr.f32.gmra.mxu0 %v1080
        %v1425 = vpop.f32.mrf.mxu0
        %v1426 = vadd.f32 %v1281, %v1425
        %v1427 = vpop.f32.mrf.mxu0
        %1428 = vmatprep.mubr.f32.mxu0 0.0
        %1429 = vmatmul.mubr.f32.gmra.mxu0 %v1085
        %v1430 = vpop.f32.mrf.mxu0
        %v1431 = vadd.f32 %v1286, %v1430
        %v1432 = vpop.f32.mrf.mxu0
        %1433 = vmatprep.mubr.f32.mxu0 0.0
        %1434 = vmatmul.mubr.f32.gmra.mxu0 %v1088
        %v1435 = vpop.f32.mrf.mxu0
        %v1436 = vadd.f32 %v1291, %v1435
        %v1437 = vpop.f32.mrf.mxu0
        %1438 = vmatprep.mubr.f32.mxu0 0.0
        %1439 = vmatmul.mubr.f32.gmra.mxu0 %v1093
        %v1440 = vpop.f32.mrf.mxu0
        %v1441 = vadd.f32 %v1296, %v1440
        %v1442 = vpop.f32.mrf.mxu0
        %1443 = vmatprep.mubr.f32.mxu0 0.0
        %1444 = vmatmul.mubr.f32.gmra.mxu0 %v1096
        %v1445 = vpop.f32.mrf.mxu0
        %v1446 = vadd.f32 %v1301, %v1445
        %v1447 = vpop.f32.mrf.mxu0
        %1448 = vmatprep.mubr.f32.mxu0 0.0
        %1449 = vmatmul.mubr.f32.gmra.mxu0 %v1101
        %v1450 = vpop.f32.mrf.mxu0
        %v1451 = vadd.f32 %v1306, %v1450
        %v1452 = vpop.f32.mrf.mxu0
        %1453 = vmatprep.mubr.f32.mxu0 0.0
        %1454 = vmatmul.mubr.f32.gmra.mxu0 %v1104
        %v1455 = vpop.f32.mrf.mxu0
        %v1456 = vadd.f32 %v1311, %v1455
        %v1457 = vpop.f32.mrf.mxu0
        %1458 = vmatprep.mubr.f32.mxu0 0.0
        %1459 = vmatmul.mubr.f32.gmra.mxu0 %v1109
        %v1460 = vpop.f32.mrf.mxu0
        %v1461 = vadd.f32 %v1316, %v1460
        %v1462 = vpop.f32.mrf.mxu0
        %1463 = vmatprep.mubr.f32.mxu0 0.0
        %1464 = vmatmul.mubr.f32.gmra.mxu0 %v1112
        %v1465 = vpop.f32.mrf.mxu0
        %v1466 = vadd.f32 %v1321, %v1465
        %v1467 = vpop.f32.mrf.mxu0
        %1468 = vmatprep.mubr.f32.mxu0 0.0
        %1469 = vmatmul.mubr.f32.gmra.mxu0 %v1117
        %v1470 = vpop.f32.mrf.mxu0
        %v1471 = vadd.f32 %v1326, %v1470
        %v1472 = vpop.f32.mrf.mxu0
        %1473 = vmatprep.mubr.f32.mxu0 0.0
        %1474 = vmatmul.mubr.f32.gmra.mxu0 %v1120
        %v1475 = vpop.f32.mrf.mxu0
        %v1476 = vadd.f32 %v1331, %v1475
        %v1477 = vpop.f32.mrf.mxu0
        %1478 = vmatprep.mubr.f32.mxu0 0.0
        %1479 = vmatmul.mubr.f32.gmra.mxu0 %v1125
        %v1480 = vpop.f32.mrf.mxu0
        %v1481 = vadd.f32 %v1336, %v1480
        %v1482 = vpop.f32.mrf.mxu0
        %1483 = vmatprep.mubr.f32.mxu0 0.0
        %1484 = vmatmul.mubr.f32.gmra.mxu0 %v1128
        %v1485 = vpop.f32.mrf.mxu0
        %v1486 = vadd.f32 %v1341, %v1485
        %v1487 = vpop.f32.mrf.mxu0
        %1488 = vdwg.mxu0
        %v1489 = vld [vmem:[%s7] sm:$0x1]
        %v1491 = vlaneseq
        %v1492 = vshrl.u32 %v1491, 7
        %v1493 = vsub.s32 0, %v1492
        %v1494 = vrot.slane %v1489, %v1493
        %v1496 = vadd.f32 %v1411, %v1494
        %v1497 = vadd.f32 %v1416, %v1494
        %v1498 = vadd.f32 %v1421, %v1494
        %v1499 = vadd.f32 %v1426, %v1494
        %v1500 = vadd.f32 %v1431, %v1494
        %v1501 = vadd.f32 %v1436, %v1494
        %v1502 = vadd.f32 %v1441, %v1494
        %v1503 = vadd.f32 %v1446, %v1494
        %v1504 = vadd.f32 %v1451, %v1494
        %v1505 = vadd.f32 %v1456, %v1494
        %v1506 = vadd.f32 %v1461, %v1494
        %v1507 = vadd.f32 %v1466, %v1494
        %v1508 = vadd.f32 %v1471, %v1494
        %v1509 = vadd.f32 %v1476, %v1494
        %v1510 = vadd.f32 %v1481, %v1494
        %v1511 = vadd.f32 %v1486, %v1494
        %1512 = vst [vmem:[%s301] sm:$0xff] %v1496
        %1513 = vst [vmem:[%s301 + $0x8] sm:$0xff] %v1497
        %1514 = vst [vmem:[%s301 + $0x10] sm:$0xff] %v1498
        %1515 = vst [vmem:[%s301 + $0x18] sm:$0xff] %v1499
        %1516 = vst [vmem:[%s301 + $0x20] sm:$0xff] %v1500
        %1517 = vst [vmem:[%s301 + $0x28] sm:$0xff] %v1501
        %1518 = vst [vmem:[%s301 + $0x30] sm:$0xff] %v1502
        %1519 = vst [vmem:[%s301 + $0x38] sm:$0xff] %v1503
        %1520 = vst [vmem:[%s301 + $0x40] sm:$0xff] %v1504
        %1521 = vst [vmem:[%s301 + $0x48] sm:$0xff] %v1505
        %1522 = vst [vmem:[%s301 + $0x50] sm:$0xff] %v1506
        %1523 = vst [vmem:[%s301 + $0x58] sm:$0xff] %v1507
        %1524 = vst [vmem:[%s301 + $0x60] sm:$0xff] %v1508
        %1525 = vst [vmem:[%s301 + $0x68] sm:$0xff] %v1509
        %1526 = vst [vmem:[%s301 + $0x70] sm:$0xff] %v1510
        %1527 = vst [vmem:[%s301 + $0x78] sm:$0xff] %v1511
      $region60: #{model_forward.1} parent=51 // pred_fallthru
        _
      %s1528 = smul.u32 %s24, %s23
      %s1529 = smul.u32 16, %s1528
      %p1530 = scmp.lt.s32.totalorder %s1529, 15
      %s1531 = scalar_select %p1530, %s1529, 15
      %s1532 = smul.addr %s1531, 8
      %s1533 = scalar_lea.vmem %s8, %s1532
      // Predicated region
      $region61: #{model_forward.1} parent=51 // pred_check
        %p1534 = pneg %p219
      $region62: #{model_forward.1} parent=51 // pred_check_branch
        %1536 = sbr.rel (%p1534) target = $region64
      $region63: #{model_forward.1} parent=51 // pred_region
        %s1537 = smul.u32 %s24, %s23
        %s1538 = smul.u32 16, %s1537
      $region64: #{model_forward.1} parent=51 // pred_fallthru
        _
    $region52: #{model_forward.1} parent=5 // pred_fallthru
      _
    %p1539 = scmp.le.s32.totalorder 2, %s14
    // Predicated region
    $region65: #{model_forward.1} parent=5 // pred_check
      %p1540 = pneg %p1539
    $region66: #{model_forward.1} parent=5 // pred_check_branch
      %1542 = sbr.rel (%p1540) target = $region68
    $region67: #{model_forward.1} parent=5 // pred_region
      %s1543 = ssub.s32 %s14, 2
      // Predicated region
      $region69: #{model_forward.1} parent=67 // pred_check
        %p1544 = pneg %p225
      $region70: #{model_forward.1} parent=67 // pred_check_branch
        %1546 = sbr.rel (%p1544) target = $region72
      $region71: #{model_forward.1} parent=67 // pred_region
        %s1547 = smul.u32 %s26, %s25
        %s1548 = smul.u32 16, %s1547
        %p1549 = scmp.lt.s32.totalorder %s1548, 15
        %s1550 = scalar_select %p1549, %s1548, 15
        %s1551 = smul.addr %s1550, 8
        %s1552 = scalar_lea.vmem %s8, %s1551
      $region72: #{model_forward.1} parent=67 // pred_fallthru
        _
    $region68: #{model_forward.1} parent=5 // pred_fallthru
      _
  $region6: #{model_forward.1} parent=0 // loop_footer
    %s18 = sadd.s32 1, %s14
  $region7: #{model_forward.1} parent=0 // loop_footer_branch
    %13 = sbr.rel target = $region3
  $region8: #{model_forward.1} parent=0 // loop_exit
    _

</llo_original>
